<compile_context>
chip_gen: v6e
topology: v6e:2x2x1
jax: 0.10.0
libtpu: 0.0.40
codegen_flags: <defaults>
</compile_context>

<pallas_src>
import functools

import jax
import jax.numpy as jnp
from jax import lax
from jax.experimental import pallas as pl
from jax.experimental.pallas import tpu as pltpu


# ---------------- hyperparameters (mirror HyperParams fields used) -----------
H_IN = 32                      # hps.cmp_hidden_size  (latent size)
H_RNN = 32                     # hps.cmp_dec_rnn_hidden_size
RES_NTH_NOTE = 4               # hps.data_resolution_nth_note
LENGTH_BARS = 2                # hps.data_length_bars
T = RES_NTH_NOTE * LENGTH_BARS           # sequence_length = 8
NOTE_LOW, NOTE_HIGH = 48, 83
N_NOTE = NOTE_HIGH - NOTE_LOW + 1        # n_note_class = 36
N_PAD = 128                    # lane-dense padded FC output width

B_TOTAL = 16                   # latents in the demo batch
B_BLK_MAX = 256                # batch tile cap (fills v6e/v7x MXU M-dim; 2x v5e MXU)


def _round_up(n, m):
    return ((n + m - 1) // m) * m


# ---------------- Pallas kernel ----------------------------------------------
def decoder_kernel(x_ref, wih_ref, bias_ref, whh_ref, wfc_ref, bfc_ref, out_ref,
                   *, seq_len):
    # Loop-invariant loads (weights / biases), hoisted out of the unrolled loop.
    x = x_ref[...]            # (b_blk, H_IN)
    wih = wih_ref[...]        # (H_IN, H_RNN)
    whh = whh_ref[...]        # (H_RNN, H_RNN)
    wfc = wfc_ref[...]        # (H_RNN, N_PAD)   lane-dense padded FC weights
    bias = bias_ref[...]      # (1, H_RNN)       b_ih + b_hh folded in wrapper
    bfc = bfc_ref[...]        # (1, N_PAD)

    # The latent is identical at every step -> input projection computed once.
    pre = jnp.dot(x, wih, preferred_element_type=jnp.float32) + bias   # (b_blk, H_RNN)

    # Recurrence h_t = tanh(pre + h_{t-1} @ W_hh^T), h_0 = 0 (t=0 matmul skipped).
    # FC is applied per step: only one hidden state stays live (no register-resident
    # stack, no sublane transpose) and each store is a full dense (b_blk, 128) slab.
    h = jnp.tanh(pre)
    out_ref[0] = jnp.dot(h, wfc, preferred_element_type=jnp.float32) + bfc
    for t in range(1, seq_len):                                        # static unroll, T small
        h = jnp.tanh(pre + jnp.dot(h, whh, preferred_element_type=jnp.float32))
        out_ref[t] = jnp.dot(h, wfc, preferred_element_type=jnp.float32) + bfc


def decoder_forward(x, w_ih_t, b_ih, w_hh_t, b_hh, w_fc_t, b_fc):
    """x: (n_lat, H_IN) float32 -> (n_lat*T, N_NOTE) float32."""
    n_lat = x.shape[0]

    # Batch tile: one block for small batches, large MXU-filling tiles otherwise.
    # Pad the batch to a multiple of the tile; padded rows are sliced off at the end.
    b_blk = min(B_BLK_MAX, _round_up(n_lat, 8))
    n_pad = _round_up(n_lat, b_blk)
    if n_pad != n_lat:
        x = jnp.pad(x, ((0, n_pad - n_lat), (0, 0)))
    grid = (n_pad // b_blk,)

    # Fold the two RNN biases; pad FC params to a lane-dense 128-wide output.
    bias = (b_ih + b_hh).reshape(1, H_RNN)
    w_fc_pad = jnp.pad(w_fc_t, ((0, 0), (0, N_PAD - N_NOTE)))
    b_fc_pad = jnp.pad(b_fc.reshape(1, N_NOTE), ((0, 0), (0, N_PAD - N_NOTE)))

    kernel = functools.partial(decoder_kernel, seq_len=T)

    const = lambda shape: pl.BlockSpec(shape, lambda i: (0,) * len(shape))
    in_specs = [
        pl.BlockSpec((b_blk, H_IN), lambda i: (i, 0)),   # x: blocked along latents
        const((H_IN, H_RNN)),                            # W_ih^T
        const((1, H_RNN)),                               # b_ih + b_hh
        const((H_RNN, H_RNN)),                           # W_hh^T
        const((H_RNN, N_PAD)),                           # W_fc^T (padded)
        const((1, N_PAD)),                               # b_fc  (padded)
    ]
    # Time-major output: out[t] is a full, lane-dense (b_blk, 128) store.
    out_specs = pl.BlockSpec((T, b_blk, N_PAD), lambda i: (0, i, 0))

    out = pl.pallas_call(
        kernel,
        out_shape=jax.ShapeDtypeStruct((T, n_pad, N_PAD), jnp.float32),
        grid=grid,
        in_specs=in_specs,
        out_specs=out_specs,
        compiler_params=pltpu.CompilerParams(dimension_semantics=("parallel",)),
    )(x, w_ih_t, bias, w_hh_t, w_fc_pad, b_fc_pad)

    # Drop batch/lane padding, restore torch's (b*T + t) row order (tiny HBM reshuffle).
    out = out[:, :n_lat, :N_NOTE]                         # (T, n_lat, N_NOTE)
    return jnp.transpose(out, (1, 0, 2)).reshape(n_lat * T, N_NOTE)


# ---------------- reference (pure JAX) for sanity -----------------------------
def decoder_reference(x, w_ih_t, b_ih, w_hh_t, b_hh, w_fc_t, b_fc):
    n_lat = x.shape[0]
    pre = x @ w_ih_t + b_ih + b_hh                                    # (n_lat, H_rnn)

    def step(h, _):
        h_new = jnp.tanh(pre + h @ w_hh_t)
        return h_new, h_new

    h0 = jnp.zeros((n_lat, H_RNN), jnp.float32)
    _, hs = lax.scan(step, h0, None, length=T)                        # (T, n_lat, H)
    hs = jnp.transpose(hs, (1, 0, 2))                                 # (n_lat, T, H)
    out = hs @ w_fc_t + b_fc                                          # (n_lat, T, N)
    return out.reshape(-1, N_NOTE)


# ---------------- deterministic parameter init --------------------------------
def init_params(key):
    ks = jax.random.split(key, 6)
    s_rnn = 1.0 / jnp.sqrt(H_RNN)
    s_fc = 1.0 / jnp.sqrt(H_RNN)
    # Stored already transposed relative to PyTorch (kernel does x @ W^T directly).
    w_ih_t = jax.random.uniform(ks[0], (H_IN, H_RNN), jnp.float32, -s_rnn, s_rnn)
    w_hh_t = jax.random.uniform(ks[1], (H_RNN, H_RNN), jnp.float32, -s_rnn, s_rnn)
    b_ih = jax.random.uniform(ks[2], (1, H_RNN), jnp.float32, -s_rnn, s_rnn)
    b_hh = jax.random.uniform(ks[3], (1, H_RNN), jnp.float32, -s_rnn, s_rnn)
    w_fc_t = jax.random.uniform(ks[4], (H_RNN, N_NOTE), jnp.float32, -s_fc, s_fc)
    b_fc = jax.random.uniform(ks[5], (1, N_NOTE), jnp.float32, -s_fc, s_fc)
    return w_ih_t, b_ih, w_hh_t, b_hh, w_fc_t, b_fc


if __name__ == "__main__":
    key = jax.random.PRNGKey(0)
    k_x, k_p = jax.random.split(key)
    x = jax.random.normal(k_x, (B_TOTAL, H_IN), jnp.float32)           # LatentBatchTensor
    params = init_params(k_p)

    out = jax.block_until_ready(decoder_forward(x, *params))
    ref = decoder_reference(x, *params)

    assert out.shape == (B_TOTAL * T, N_NOTE), out.shape
    assert jnp.allclose(out, ref, atol=1e-5, rtol=1e-5), "mismatch vs reference"

    # Also cover the non-multiple (batch-padding) path.
    x2 = x[:2]
    out2 = jax.block_until_ready(decoder_forward(x2, *params))
    ref2 = decoder_reference(x2, *params)
    assert out2.shape == (2 * T, N_NOTE), out2.shape
    assert jnp.allclose(out2, ref2, atol=1e-5, rtol=1e-5), "mismatch vs reference (small batch)"

    print("KERNEL_OK")
</pallas_src>

<mosaic_0001>
module attributes {stable_mosaic.version = 11 : i64} {
  func.func @decoder_kernel(%arg0: i32, %arg1: memref<16x32xf32, #tpu.memory_space<vmem>>, %arg2: memref<32x32xf32, #tpu.memory_space<vmem>>, %arg3: memref<1x32xf32, #tpu.memory_space<vmem>>, %arg4: memref<32x32xf32, #tpu.memory_space<vmem>>, %arg5: memref<32x128xf32, #tpu.memory_space<vmem>>, %arg6: memref<1x128xf32, #tpu.memory_space<vmem>>, %arg7: memref<8x16x128xf32, #tpu.memory_space<vmem>>) attributes {dimension_semantics = [#tpu.dimension_semantics<parallel>], iteration_bounds = array<i64: 1>, scalar_prefetch = 0 : i64, scratch_operands = 0 : i64, tpu.core_type = #tpu.core_type<tc>, window_params = [{transform_indices = @transform_0, window_bounds = array<i64: 16, 32>}, {pipeline_mode = #tpu.pipeline_mode<synchronous>, transform_indices = @transform_1, window_bounds = array<i64: 32, 32>}, {pipeline_mode = #tpu.pipeline_mode<synchronous>, transform_indices = @transform_2, window_bounds = array<i64: 1, 32>}, {pipeline_mode = #tpu.pipeline_mode<synchronous>, transform_indices = @transform_3, window_bounds = array<i64: 32, 32>}, {pipeline_mode = #tpu.pipeline_mode<synchronous>, transform_indices = @transform_4, window_bounds = array<i64: 32, 128>}, {pipeline_mode = #tpu.pipeline_mode<synchronous>, transform_indices = @transform_5, window_bounds = array<i64: 1, 128>}, {transform_indices = @transform_6, window_bounds = array<i64: 8, 16, 128>}]} {
    %c0 = arith.constant 0 : index
    %c0_0 = arith.constant 0 : index
    %0 = vector.load %arg1[%c0, %c0_0] : memref<16x32xf32, #tpu.memory_space<vmem>>, vector<16x32xf32>
    %c0_1 = arith.constant 0 : index
    %c0_2 = arith.constant 0 : index
    %1 = vector.load %arg2[%c0_1, %c0_2] : memref<32x32xf32, #tpu.memory_space<vmem>>, vector<32x32xf32>
    %c0_3 = arith.constant 0 : index
    %c0_4 = arith.constant 0 : index
    %2 = vector.load %arg4[%c0_3, %c0_4] : memref<32x32xf32, #tpu.memory_space<vmem>>, vector<32x32xf32>
    %c0_5 = arith.constant 0 : index
    %c0_6 = arith.constant 0 : index
    %3 = vector.load %arg5[%c0_5, %c0_6] : memref<32x128xf32, #tpu.memory_space<vmem>>, vector<32x128xf32>
    %c0_7 = arith.constant 0 : index
    %c0_8 = arith.constant 0 : index
    %4 = vector.load %arg3[%c0_7, %c0_8] : memref<1x32xf32, #tpu.memory_space<vmem>>, vector<1x32xf32>
    %c0_9 = arith.constant 0 : index
    %c0_10 = arith.constant 0 : index
    %5 = vector.load %arg6[%c0_9, %c0_10] : memref<1x128xf32, #tpu.memory_space<vmem>>, vector<1x128xf32>
    %cst = arith.constant dense<0.000000e+00> : vector<16x32xf32>
    %6 = tpu.matmul %0, %1, %cst {dimension_numbers = #tpu.dot_dimension_numbers<[1], [0], [0], [1], [0, 0, 1, 1], [], []>} : vector<16x32xf32>, vector<32x32xf32>, vector<16x32xf32> -> vector<16x32xf32>
    %7 = vector.broadcast %4 : vector<1x32xf32> to vector<16x32xf32>
    %8 = arith.addf %6, %7 : vector<16x32xf32>
    %9 = math.tanh %8 : vector<16x32xf32>
    %cst_11 = arith.constant dense<0.000000e+00> : vector<16x128xf32>
    %10 = tpu.matmul %9, %3, %cst_11 {dimension_numbers = #tpu.dot_dimension_numbers<[1], [0], [0], [1], [0, 0, 1, 1], [], []>} : vector<16x32xf32>, vector<32x128xf32>, vector<16x128xf32> -> vector<16x128xf32>
    %11 = vector.broadcast %5 : vector<1x128xf32> to vector<16x128xf32>
    %12 = arith.addf %10, %11 : vector<16x128xf32>
    %c0_12 = arith.constant 0 : index
    %c0_13 = arith.constant 0 : index
    %c0_14 = arith.constant 0 : index
    %13 = vector.load %arg7[%c0_12, %c0_13, %c0_14] : memref<8x16x128xf32, #tpu.memory_space<vmem>>, vector<1x16x128xf32>
    %14 = vector.shape_cast %13 : vector<1x16x128xf32> to vector<16x128xf32>
    %15 = vector.shape_cast %12 : vector<16x128xf32> to vector<1x16x128xf32>
    tpu.vector_store %arg7[%c0_12, %c0_13, %c0_14], %15 {strides = array<i32>} : memref<8x16x128xf32, #tpu.memory_space<vmem>>, vector<1x16x128xf32>,
    %cst_15 = arith.constant dense<0.000000e+00> : vector<16x32xf32>
    %16 = tpu.matmul %9, %2, %cst_15 {dimension_numbers = #tpu.dot_dimension_numbers<[1], [0], [0], [1], [0, 0, 1, 1], [], []>} : vector<16x32xf32>, vector<32x32xf32>, vector<16x32xf32> -> vector<16x32xf32>
    %17 = arith.addf %8, %16 : vector<16x32xf32>
    %18 = math.tanh %17 : vector<16x32xf32>
    %cst_16 = arith.constant dense<0.000000e+00> : vector<16x128xf32>
    %19 = tpu.matmul %18, %3, %cst_16 {dimension_numbers = #tpu.dot_dimension_numbers<[1], [0], [0], [1], [0, 0, 1, 1], [], []>} : vector<16x32xf32>, vector<32x128xf32>, vector<16x128xf32> -> vector<16x128xf32>
    %20 = vector.broadcast %5 : vector<1x128xf32> to vector<16x128xf32>
    %21 = arith.addf %19, %20 : vector<16x128xf32>
    %c1 = arith.constant 1 : index
    %c0_17 = arith.constant 0 : index
    %c0_18 = arith.constant 0 : index
    %22 = vector.load %arg7[%c1, %c0_17, %c0_18] : memref<8x16x128xf32, #tpu.memory_space<vmem>>, vector<1x16x128xf32>
    %23 = vector.shape_cast %22 : vector<1x16x128xf32> to vector<16x128xf32>
    %24 = vector.shape_cast %21 : vector<16x128xf32> to vector<1x16x128xf32>
    tpu.vector_store %arg7[%c1, %c0_17, %c0_18], %24 {strides = array<i32>} : memref<8x16x128xf32, #tpu.memory_space<vmem>>, vector<1x16x128xf32>,
    %cst_19 = arith.constant dense<0.000000e+00> : vector<16x32xf32>
    %25 = tpu.matmul %18, %2, %cst_19 {dimension_numbers = #tpu.dot_dimension_numbers<[1], [0], [0], [1], [0, 0, 1, 1], [], []>} : vector<16x32xf32>, vector<32x32xf32>, vector<16x32xf32> -> vector<16x32xf32>
    %26 = arith.addf %8, %25 : vector<16x32xf32>
    %27 = math.tanh %26 : vector<16x32xf32>
    %cst_20 = arith.constant dense<0.000000e+00> : vector<16x128xf32>
    %28 = tpu.matmul %27, %3, %cst_20 {dimension_numbers = #tpu.dot_dimension_numbers<[1], [0], [0], [1], [0, 0, 1, 1], [], []>} : vector<16x32xf32>, vector<32x128xf32>, vector<16x128xf32> -> vector<16x128xf32>
    %29 = vector.broadcast %5 : vector<1x128xf32> to vector<16x128xf32>
    %30 = arith.addf %28, %29 : vector<16x128xf32>
    %c2 = arith.constant 2 : index
    %c0_21 = arith.constant 0 : index
    %c0_22 = arith.constant 0 : index
    %31 = vector.load %arg7[%c2, %c0_21, %c0_22] : memref<8x16x128xf32, #tpu.memory_space<vmem>>, vector<1x16x128xf32>
    %32 = vector.shape_cast %31 : vector<1x16x128xf32> to vector<16x128xf32>
    %33 = vector.shape_cast %30 : vector<16x128xf32> to vector<1x16x128xf32>
    tpu.vector_store %arg7[%c2, %c0_21, %c0_22], %33 {strides = array<i32>} : memref<8x16x128xf32, #tpu.memory_space<vmem>>, vector<1x16x128xf32>,
    %cst_23 = arith.constant dense<0.000000e+00> : vector<16x32xf32>
    %34 = tpu.matmul %27, %2, %cst_23 {dimension_numbers = #tpu.dot_dimension_numbers<[1], [0], [0], [1], [0, 0, 1, 1], [], []>} : vector<16x32xf32>, vector<32x32xf32>, vector<16x32xf32> -> vector<16x32xf32>
    %35 = arith.addf %8, %34 : vector<16x32xf32>
    %36 = math.tanh %35 : vector<16x32xf32>
    %cst_24 = arith.constant dense<0.000000e+00> : vector<16x128xf32>
    %37 = tpu.matmul %36, %3, %cst_24 {dimension_numbers = #tpu.dot_dimension_numbers<[1], [0], [0], [1], [0, 0, 1, 1], [], []>} : vector<16x32xf32>, vector<32x128xf32>, vector<16x128xf32> -> vector<16x128xf32>
    %38 = vector.broadcast %5 : vector<1x128xf32> to vector<16x128xf32>
    %39 = arith.addf %37, %38 : vector<16x128xf32>
    %c3 = arith.constant 3 : index
    %c0_25 = arith.constant 0 : index
    %c0_26 = arith.constant 0 : index
    %40 = vector.load %arg7[%c3, %c0_25, %c0_26] : memref<8x16x128xf32, #tpu.memory_space<vmem>>, vector<1x16x128xf32>
    %41 = vector.shape_cast %40 : vector<1x16x128xf32> to vector<16x128xf32>
    %42 = vector.shape_cast %39 : vector<16x128xf32> to vector<1x16x128xf32>
    tpu.vector_store %arg7[%c3, %c0_25, %c0_26], %42 {strides = array<i32>} : memref<8x16x128xf32, #tpu.memory_space<vmem>>, vector<1x16x128xf32>,
    %cst_27 = arith.constant dense<0.000000e+00> : vector<16x32xf32>
    %43 = tpu.matmul %36, %2, %cst_27 {dimension_numbers = #tpu.dot_dimension_numbers<[1], [0], [0], [1], [0, 0, 1, 1], [], []>} : vector<16x32xf32>, vector<32x32xf32>, vector<16x32xf32> -> vector<16x32xf32>
    %44 = arith.addf %8, %43 : vector<16x32xf32>
    %45 = math.tanh %44 : vector<16x32xf32>
    %cst_28 = arith.constant dense<0.000000e+00> : vector<16x128xf32>
    %46 = tpu.matmul %45, %3, %cst_28 {dimension_numbers = #tpu.dot_dimension_numbers<[1], [0], [0], [1], [0, 0, 1, 1], [], []>} : vector<16x32xf32>, vector<32x128xf32>, vector<16x128xf32> -> vector<16x128xf32>
    %47 = vector.broadcast %5 : vector<1x128xf32> to vector<16x128xf32>
    %48 = arith.addf %46, %47 : vector<16x128xf32>
    %c4 = arith.constant 4 : index
    %c0_29 = arith.constant 0 : index
    %c0_30 = arith.constant 0 : index
    %49 = vector.load %arg7[%c4, %c0_29, %c0_30] : memref<8x16x128xf32, #tpu.memory_space<vmem>>, vector<1x16x128xf32>
    %50 = vector.shape_cast %49 : vector<1x16x128xf32> to vector<16x128xf32>
    %51 = vector.shape_cast %48 : vector<16x128xf32> to vector<1x16x128xf32>
    tpu.vector_store %arg7[%c4, %c0_29, %c0_30], %51 {strides = array<i32>} : memref<8x16x128xf32, #tpu.memory_space<vmem>>, vector<1x16x128xf32>,
    %cst_31 = arith.constant dense<0.000000e+00> : vector<16x32xf32>
    %52 = tpu.matmul %45, %2, %cst_31 {dimension_numbers = #tpu.dot_dimension_numbers<[1], [0], [0], [1], [0, 0, 1, 1], [], []>} : vector<16x32xf32>, vector<32x32xf32>, vector<16x32xf32> -> vector<16x32xf32>
    %53 = arith.addf %8, %52 : vector<16x32xf32>
    %54 = math.tanh %53 : vector<16x32xf32>
    %cst_32 = arith.constant dense<0.000000e+00> : vector<16x128xf32>
    %55 = tpu.matmul %54, %3, %cst_32 {dimension_numbers = #tpu.dot_dimension_numbers<[1], [0], [0], [1], [0, 0, 1, 1], [], []>} : vector<16x32xf32>, vector<32x128xf32>, vector<16x128xf32> -> vector<16x128xf32>
    %56 = vector.broadcast %5 : vector<1x128xf32> to vector<16x128xf32>
    %57 = arith.addf %55, %56 : vector<16x128xf32>
    %c5 = arith.constant 5 : index
    %c0_33 = arith.constant 0 : index
    %c0_34 = arith.constant 0 : index
    %58 = vector.load %arg7[%c5, %c0_33, %c0_34] : memref<8x16x128xf32, #tpu.memory_space<vmem>>, vector<1x16x128xf32>
    %59 = vector.shape_cast %58 : vector<1x16x128xf32> to vector<16x128xf32>
    %60 = vector.shape_cast %57 : vector<16x128xf32> to vector<1x16x128xf32>
    tpu.vector_store %arg7[%c5, %c0_33, %c0_34], %60 {strides = array<i32>} : memref<8x16x128xf32, #tpu.memory_space<vmem>>, vector<1x16x128xf32>,
    %cst_35 = arith.constant dense<0.000000e+00> : vector<16x32xf32>
    %61 = tpu.matmul %54, %2, %cst_35 {dimension_numbers = #tpu.dot_dimension_numbers<[1], [0], [0], [1], [0, 0, 1, 1], [], []>} : vector<16x32xf32>, vector<32x32xf32>, vector<16x32xf32> -> vector<16x32xf32>
    %62 = arith.addf %8, %61 : vector<16x32xf32>
    %63 = math.tanh %62 : vector<16x32xf32>
    %cst_36 = arith.constant dense<0.000000e+00> : vector<16x128xf32>
    %64 = tpu.matmul %63, %3, %cst_36 {dimension_numbers = #tpu.dot_dimension_numbers<[1], [0], [0], [1], [0, 0, 1, 1], [], []>} : vector<16x32xf32>, vector<32x128xf32>, vector<16x128xf32> -> vector<16x128xf32>
    %65 = vector.broadcast %5 : vector<1x128xf32> to vector<16x128xf32>
    %66 = arith.addf %64, %65 : vector<16x128xf32>
    %c6 = arith.constant 6 : index
    %c0_37 = arith.constant 0 : index
    %c0_38 = arith.constant 0 : index
    %67 = vector.load %arg7[%c6, %c0_37, %c0_38] : memref<8x16x128xf32, #tpu.memory_space<vmem>>, vector<1x16x128xf32>
    %68 = vector.shape_cast %67 : vector<1x16x128xf32> to vector<16x128xf32>
    %69 = vector.shape_cast %66 : vector<16x128xf32> to vector<1x16x128xf32>
    tpu.vector_store %arg7[%c6, %c0_37, %c0_38], %69 {strides = array<i32>} : memref<8x16x128xf32, #tpu.memory_space<vmem>>, vector<1x16x128xf32>,
    %cst_39 = arith.constant dense<0.000000e+00> : vector<16x32xf32>
    %70 = tpu.matmul %63, %2, %cst_39 {dimension_numbers = #tpu.dot_dimension_numbers<[1], [0], [0], [1], [0, 0, 1, 1], [], []>} : vector<16x32xf32>, vector<32x32xf32>, vector<16x32xf32> -> vector<16x32xf32>
    %71 = arith.addf %8, %70 : vector<16x32xf32>
    %72 = math.tanh %71 : vector<16x32xf32>
    %cst_40 = arith.constant dense<0.000000e+00> : vector<16x128xf32>
    %73 = tpu.matmul %72, %3, %cst_40 {dimension_numbers = #tpu.dot_dimension_numbers<[1], [0], [0], [1], [0, 0, 1, 1], [], []>} : vector<16x32xf32>, vector<32x128xf32>, vector<16x128xf32> -> vector<16x128xf32>
    %74 = vector.broadcast %5 : vector<1x128xf32> to vector<16x128xf32>
    %75 = arith.addf %73, %74 : vector<16x128xf32>
    %c7 = arith.constant 7 : index
    %c0_41 = arith.constant 0 : index
    %c0_42 = arith.constant 0 : index
    %76 = vector.load %arg7[%c7, %c0_41, %c0_42] : memref<8x16x128xf32, #tpu.memory_space<vmem>>, vector<1x16x128xf32>
    %77 = vector.shape_cast %76 : vector<1x16x128xf32> to vector<16x128xf32>
    %78 = vector.shape_cast %75 : vector<16x128xf32> to vector<1x16x128xf32>
    tpu.vector_store %arg7[%c7, %c0_41, %c0_42], %78 {strides = array<i32>} : memref<8x16x128xf32, #tpu.memory_space<vmem>>, vector<1x16x128xf32>,
    return
  }
  func.func @transform_0(%arg0: i32) -> (i32, i32) {
    %c0_i32 = arith.constant 0 : i32
    %c0_i32_0 = arith.constant 0 : i32
    return %arg0, %c0_i32 : i32, i32
  }
  func.func @transform_1(%arg0: i32) -> (i32, i32) {
    %c0_i32 = arith.constant 0 : i32
    %c0_i32_0 = arith.constant 0 : i32
    %c0_i32_1 = arith.constant 0 : i32
    return %c0_i32, %c0_i32_0 : i32, i32
  }
  func.func @transform_2(%arg0: i32) -> (i32, i32) {
    %c0_i32 = arith.constant 0 : i32
    %c0_i32_0 = arith.constant 0 : i32
    %c0_i32_1 = arith.constant 0 : i32
    return %c0_i32, %c0_i32_0 : i32, i32
  }
  func.func @transform_3(%arg0: i32) -> (i32, i32) {
    %c0_i32 = arith.constant 0 : i32
    %c0_i32_0 = arith.constant 0 : i32
    %c0_i32_1 = arith.constant 0 : i32
    return %c0_i32, %c0_i32_0 : i32, i32
  }
  func.func @transform_4(%arg0: i32) -> (i32, i32) {
    %c0_i32 = arith.constant 0 : i32
    %c0_i32_0 = arith.constant 0 : i32
    %c0_i32_1 = arith.constant 0 : i32
    return %c0_i32, %c0_i32_0 : i32, i32
  }
  func.func @transform_5(%arg0: i32) -> (i32, i32) {
    %c0_i32 = arith.constant 0 : i32
    %c0_i32_0 = arith.constant 0 : i32
    %c0_i32_1 = arith.constant 0 : i32
    return %c0_i32, %c0_i32_0 : i32, i32
  }
  func.func @transform_6(%arg0: i32) -> (i32, i32, i32) {
    %c0_i32 = arith.constant 0 : i32
    %c0_i32_0 = arith.constant 0 : i32
    %c0_i32_1 = arith.constant 0 : i32
    return %c0_i32, %arg0, %c0_i32_0 : i32, i32, i32
  }
}

</mosaic_0001>

<llo_original>
// kernel: tpu_custom_call.1
$region0: #{tpu_custom_call.1}
  #allocation0 [shape = 'u32[]', space=smem, size = 0x4, offset = 0x4, fixed_abs, tag = 'smem constant byte address 0x4 - core index']
  #allocation1 [shape = 'u32[144,128]{1,0:T(1,128)}', space=vmem, size = 0x12000, scoped, tag = 'internal scratch']
  %s0 = inlined_call_operand.hbm [shape: f32[16,32], index: 0, kind: input, shape index: {}]
  %s1 = inlined_call_operand.hbm [shape: f32[32,32], index: 1, kind: input, shape index: {}]
  %s2 = inlined_call_operand.vmem [shape: f32[1,32], index: 2, kind: input, shape index: {}]
  %s3 = inlined_call_operand.hbm [shape: f32[32,32], index: 3, kind: input, shape index: {}]
  %s4 = inlined_call_operand.hbm [shape: f32[32,128], index: 4, kind: input, shape index: {}]
  %s5 = inlined_call_operand.vmem [shape: f32[1,128], index: 5, kind: input, shape index: {}]
  %s6 = inlined_call_operand.hbm [shape: f32[8,16,128], index: 6, kind: output, shape index: {}]
  %s7 = sld [smem:[#allocation0]]
  $region50: #{tpu_custom_call.1} parent=0
    _
  %s9 = ssub.s32 1, %s7
  %s10 = scalar_select 0, %s9, %s7
  $region1: #{tpu_custom_call.1} parent=0
    #allocation2 [shape = 'u8[8192]{0}', space=vmem, size = 0x2000, scoped, tag = 'input window, operand 0, single buffered']
    #allocation3 [shape = 's32[1]{0}', space=sflag, size = 0x4, scoped, tag = 'scoped memory for tpu_custom_call.1']
    #allocation4 [shape = 's32[1]{0}', space=sflag, size = 0x4, scoped, tag = 'scoped memory for tpu_custom_call.1']
    #allocation5 [shape = 'u8[16384]{0}', space=vmem, size = 0x4000, scoped, tag = 'input window, operand 1, single buffered']
    #allocation6 [shape = 's32[1]{0}', space=sflag, size = 0x4, scoped, tag = 'scoped memory for tpu_custom_call.1']
    #allocation7 [shape = 'u8[16384]{0}', space=vmem, size = 0x4000, scoped, tag = 'input window, operand 3, single buffered']
    #allocation8 [shape = 'u8[16384]{0}', space=vmem, size = 0x4000, scoped, tag = 'input window, operand 4, single buffered']
    #allocation9 [shape = 's32[1]{0}', space=sflag, size = 0x4, scoped, tag = 'scoped memory for tpu_custom_call.1']
    #allocation10 [shape = 'u8[65536]{0}', space=vmem, size = 0x10000, scoped, tag = 'output window, operand 0, single buffered']
    %11 = vsyncpa [#allocation3], 0
    %12 = vsyncpa [#allocation6], 0
    %13 = vsyncpa [#allocation9], 0
    %14 = vsyncpa [#allocation4], 0
    // Predicated region
    $region2: #{tpu_custom_call.1} parent=1 // pred_check
      _
    $region3: #{tpu_custom_call.1} parent=1 // pred_check_branch
      %16 = sbr.rel (0) target = $region5
    $region4: #{tpu_custom_call.1} parent=1 // pred_region
      %s18 = ssub.s32 256, 256
      %19 = vsyncadd [#allocation3], %s18
      %s20 = sshll.u32 [#allocation2], 4
      %s21 = int_to_ptr.vmem [resolvable:$true] %s20
      %26 = dma.hbm_to_vmem [thread:$0]  %s0, 256, %s21, [#allocation3], 128, 128, 8
    $region5: #{tpu_custom_call.1} parent=1 // pred_fallthru
      _
    // Predicated region
    $region6: #{tpu_custom_call.1} parent=1 // pred_check
      _
    $region7: #{tpu_custom_call.1} parent=1 // pred_check_branch
      %28 = sbr.rel (0) target = $region9
    $region8: #{tpu_custom_call.1} parent=1 // pred_region
      %s30 = ssub.s32 512, 512
      %31 = vsyncadd [#allocation6], %s30
      %s32 = sshll.u32 [#allocation5], 4
      %s33 = int_to_ptr.vmem [resolvable:$true] %s32
      %38 = dma.hbm_to_vmem [thread:$0]  %s1, 512, %s33, [#allocation6], 128, 128, 8
    $region9: #{tpu_custom_call.1} parent=1 // pred_fallthru
      _
    // Predicated region
    $region10: #{tpu_custom_call.1} parent=1 // pred_check
      _
    $region11: #{tpu_custom_call.1} parent=1 // pred_check_branch
      %40 = sbr.rel (0) target = $region13
    $region12: #{tpu_custom_call.1} parent=1 // pred_region
      _
    $region13: #{tpu_custom_call.1} parent=1 // pred_fallthru
      _
    // Predicated region
    $region14: #{tpu_custom_call.1} parent=1 // pred_check
      _
    $region15: #{tpu_custom_call.1} parent=1 // pred_check_branch
      %42 = sbr.rel (0) target = $region17
    $region16: #{tpu_custom_call.1} parent=1 // pred_region
      %s44 = ssub.s32 512, 512
      %45 = vsyncadd [#allocation6], %s44
      %s46 = sshll.u32 [#allocation7], 4
      %s47 = int_to_ptr.vmem [resolvable:$true] %s46
      %52 = dma.hbm_to_vmem [thread:$0]  %s3, 512, %s47, [#allocation6], 128, 128, 8
    $region17: #{tpu_custom_call.1} parent=1 // pred_fallthru
      _
    // Predicated region
    $region18: #{tpu_custom_call.1} parent=1 // pred_check
      _
    $region19: #{tpu_custom_call.1} parent=1 // pred_check_branch
      %54 = sbr.rel (0) target = $region21
    $region20: #{tpu_custom_call.1} parent=1 // pred_region
      %s56 = ssub.s32 512, 512
      %57 = vsyncadd [#allocation9], %s56
      %s58 = sshll.u32 [#allocation8], 4
      %s59 = int_to_ptr.vmem [resolvable:$true] %s58
      %64 = dma.hbm_to_vmem [thread:$0]  %s4, 512, %s59, [#allocation9], 128, 128, 8
    $region21: #{tpu_custom_call.1} parent=1 // pred_fallthru
      _
    // Predicated region
    $region22: #{tpu_custom_call.1} parent=1 // pred_check
      _
    $region23: #{tpu_custom_call.1} parent=1 // pred_check_branch
      %66 = sbr.rel (0) target = $region25
    $region24: #{tpu_custom_call.1} parent=1 // pred_region
      _
    $region25: #{tpu_custom_call.1} parent=1 // pred_fallthru
      _
    // Predicated region
    $region26: #{tpu_custom_call.1} parent=1 // pred_check
      _
    $region27: #{tpu_custom_call.1} parent=1 // pred_check_branch
      %68 = sbr.rel (0) target = $region29
    $region28: #{tpu_custom_call.1} parent=1 // pred_region
      %69 = dma.done [#allocation3], 256
    $region29: #{tpu_custom_call.1} parent=1 // pred_fallthru
      _
    // Predicated region
    $region30: #{tpu_custom_call.1} parent=1 // pred_check
      _
    $region31: #{tpu_custom_call.1} parent=1 // pred_check_branch
      %71 = sbr.rel (0) target = $region33
    $region32: #{tpu_custom_call.1} parent=1 // pred_region
      %72 = dma.done [#allocation6], 512
    $region33: #{tpu_custom_call.1} parent=1 // pred_fallthru
      _
    // Predicated region
    $region34: #{tpu_custom_call.1} parent=1 // pred_check
      _
    $region35: #{tpu_custom_call.1} parent=1 // pred_check_branch
      %74 = sbr.rel (0) target = $region37
    $region36: #{tpu_custom_call.1} parent=1 // pred_region
      %75 = dma.done [#allocation6], 512
    $region37: #{tpu_custom_call.1} parent=1 // pred_fallthru
      _
    // Predicated region
    $region38: #{tpu_custom_call.1} parent=1 // pred_check
      _
    $region39: #{tpu_custom_call.1} parent=1 // pred_check_branch
      %77 = sbr.rel (0) target = $region41
    $region40: #{tpu_custom_call.1} parent=1 // pred_region
      %78 = dma.done [#allocation9], 512
    $region41: #{tpu_custom_call.1} parent=1 // pred_fallthru
      _
    %v79 = vld [vmem:[#allocation2] sm:$0xff]
    %v80 = vld [vmem:[#allocation2 + $0x8] sm:$0xff]
    %v81 = vld [vmem:[#allocation5] sm:$0xff]
    %v82 = vld [vmem:[#allocation5 + $0x8] sm:$0xff]
    %v83 = vld [vmem:[#allocation5 + $0x10] sm:$0xff]
    %v84 = vld [vmem:[#allocation5 + $0x18] sm:$0xff]
    %v85 = vld [vmem:[#allocation7] sm:$0xff]
    %v86 = vld [vmem:[#allocation7 + $0x8] sm:$0xff]
    %v87 = vld [vmem:[#allocation7 + $0x10] sm:$0xff]
    %v88 = vld [vmem:[#allocation7 + $0x18] sm:$0xff]
    %v89 = vld [vmem:[#allocation8] sm:$0xff]
    %v90 = vld [vmem:[#allocation8 + $0x8] sm:$0xff]
    %v91 = vld [vmem:[#allocation8 + $0x10] sm:$0xff]
    %v92 = vld [vmem:[#allocation8 + $0x18] sm:$0xff]
    %v93 = vld [vmem:[%s2] sm:$0x1]
    %v94 = vld [vmem:[%s5] sm:$0x1]
    %v96 = vlaneseq
    %v97 = vshrl.u32 %v96, 7
    %v98 = vsub.s32 0, %v97
    %v99 = vrot.slane %v93, %v98
    %vm101 = vcmask 261120
    %v103 = vsel %vm101, %v79, 0
    %v106 = vsel %vm101, %v80, 0
    %108 = vmatprep.subr.mxu0 0.0
    %109 = vmatpush1.msra.mxu0 0.0
    %110 = vmatprep.subr.mxu0 0.0
    %111 = vmatpush1.msra.mxu0 0.0
    %112 = vmatprep.subr.mxu0 0.0
    %113 = vmatpush1.msra.mxu0 0.0
    %114 = vmatprep.subr.mxu0 0.0
    %115 = vmatpush1.msra.mxu0 0.0
    %116 = vmatprep.subr.mxu0 0.0
    %117 = vmatpush1.msra.mxu0 0.0
    %118 = vmatprep.subr.mxu0 0.0
    %119 = vmatpush1.msra.mxu0 0.0
    %120 = vmatprep.subr.mxu0 0.0
    %121 = vmatpush1.msra.mxu0 0.0
    %122 = vmatprep.subr.mxu0 0.0
    %123 = vmatpush1.msra.mxu0 0.0
    %124 = vmatprep.subr.mxu0 0.0
    %125 = vmatpush1.msra.mxu0 0.0
    %126 = vmatprep.subr.mxu0 0.0
    %127 = vmatpush1.msra.mxu0 0.0
    %128 = vmatprep.subr.mxu0 0.0
    %129 = vmatpush1.msra.mxu0 0.0
    %130 = vmatprep.subr.mxu0 0.0
    %131 = vmatpush1.msra.mxu0 0.0
    %132 = vmatprep.subr.mxu0 0.0
    %133 = vmatpush1.msra.mxu0 %v84
    %134 = vmatprep.subr.mxu0 0.0
    %135 = vmatpush1.msra.mxu0 %v83
    %136 = vmatprep.subr.mxu0 0.0
    %137 = vmatpush1.msra.mxu0 %v82
    %138 = vmatprep.subr.mxu0 0.0
    %139 = vmatpush1.msra.mxu0 %v81
    %140 = vmatprep.subr.mxu0 0.0
    %141 = vmatpush2.msra.mxu0 0.0
    %142 = vmatprep.subr.mxu0 0.0
    %143 = vmatpush2.msra.mxu0 0.0
    %144 = vmatprep.subr.mxu0 0.0
    %145 = vmatpush2.msra.mxu0 0.0
    %146 = vmatprep.subr.mxu0 0.0
    %147 = vmatpush2.msra.mxu0 0.0
    %148 = vmatprep.subr.mxu0 0.0
    %149 = vmatpush2.msra.mxu0 0.0
    %150 = vmatprep.subr.mxu0 0.0
    %151 = vmatpush2.msra.mxu0 0.0
    %152 = vmatprep.subr.mxu0 0.0
    %153 = vmatpush2.msra.mxu0 0.0
    %154 = vmatprep.subr.mxu0 0.0
    %155 = vmatpush2.msra.mxu0 0.0
    %156 = vmatprep.subr.mxu0 0.0
    %157 = vmatpush2.msra.mxu0 0.0
    %158 = vmatprep.subr.mxu0 0.0
    %159 = vmatpush2.msra.mxu0 0.0
    %160 = vmatprep.subr.mxu0 0.0
    %161 = vmatpush2.msra.mxu0 0.0
    %162 = vmatprep.subr.mxu0 0.0
    %163 = vmatpush2.msra.mxu0 0.0
    %164 = vmatprep.subr.mxu0 0.0
    %165 = vmatpush2.msra.mxu0 0.0
    %166 = vmatprep.subr.mxu0 0.0
    %167 = vmatpush2.msra.mxu0 0.0
    %168 = vmatprep.subr.mxu0 0.0
    %169 = vmatpush2.msra.mxu0 0.0
    %170 = vmatprep.subr.mxu0 0.0
    %171 = vmatpush2.msra.mxu0 0.0
    %172 = vmatprep.mubr.f32.mxu0 0.0
    %173 = vmatmul.mubr.f32.gmra.mxu0 %v103
    %v174 = vpop.f32.mrf.mxu0
    %v175 = vadd.f32 %v99, %v174
    %v176 = vpop.f32.mrf.mxu0
    %177 = vmatprep.mubr.f32.mxu0 0.0
    %178 = vmatmul.mubr.f32.gmra.mxu0 %v106
    %v179 = vpop.f32.mrf.mxu0
    %v180 = vadd.f32 %v99, %v179
    %v181 = vpop.f32.mrf.mxu0
    %182 = vdwg.mxu0
    %v183 = vtanh.pop %v175
    %v184 = vtanh.pop %v180
    %v186 = vlaneseq
    %v187 = vshrl.u32 %v186, 7
    %v188 = vsub.s32 0, %v187
    %v189 = vrot.slane %v94, %v188
    %v192 = vsel %vm101, %v183, 0
    %v195 = vsel %vm101, %v184, 0
    %197 = vmatprep.subr.mxu0 0.0
    %198 = vmatpush1.msra.mxu0 0.0
    %199 = vmatprep.subr.mxu0 0.0
    %200 = vmatpush1.msra.mxu0 0.0
    %201 = vmatprep.subr.mxu0 0.0
    %202 = vmatpush1.msra.mxu0 0.0
    %203 = vmatprep.subr.mxu0 0.0
    %204 = vmatpush1.msra.mxu0 0.0
    %205 = vmatprep.subr.mxu0 0.0
    %206 = vmatpush1.msra.mxu0 0.0
    %207 = vmatprep.subr.mxu0 0.0
    %208 = vmatpush1.msra.mxu0 0.0
    %209 = vmatprep.subr.mxu0 0.0
    %210 = vmatpush1.msra.mxu0 0.0
    %211 = vmatprep.subr.mxu0 0.0
    %212 = vmatpush1.msra.mxu0 0.0
    %213 = vmatprep.subr.mxu0 0.0
    %214 = vmatpush1.msra.mxu0 0.0
    %215 = vmatprep.subr.mxu0 0.0
    %216 = vmatpush1.msra.mxu0 0.0
    %217 = vmatprep.subr.mxu0 0.0
    %218 = vmatpush1.msra.mxu0 0.0
    %219 = vmatprep.subr.mxu0 0.0
    %220 = vmatpush1.msra.mxu0 0.0
    %221 = vmatprep.subr.mxu0 0.0
    %222 = vmatpush1.msra.mxu0 %v92
    %223 = vmatprep.subr.mxu0 0.0
    %224 = vmatpush1.msra.mxu0 %v91
    %225 = vmatprep.subr.mxu0 0.0
    %226 = vmatpush1.msra.mxu0 %v90
    %227 = vmatprep.subr.mxu0 0.0
    %228 = vmatpush1.msra.mxu0 %v89
    %229 = vmatprep.subr.mxu0 0.0
    %230 = vmatpush2.msra.mxu0 0.0
    %231 = vmatprep.subr.mxu0 0.0
    %232 = vmatpush2.msra.mxu0 0.0
    %233 = vmatprep.subr.mxu0 0.0
    %234 = vmatpush2.msra.mxu0 0.0
    %235 = vmatprep.subr.mxu0 0.0
    %236 = vmatpush2.msra.mxu0 0.0
    %237 = vmatprep.subr.mxu0 0.0
    %238 = vmatpush2.msra.mxu0 0.0
    %239 = vmatprep.subr.mxu0 0.0
    %240 = vmatpush2.msra.mxu0 0.0
    %241 = vmatprep.subr.mxu0 0.0
    %242 = vmatpush2.msra.mxu0 0.0
    %243 = vmatprep.subr.mxu0 0.0
    %244 = vmatpush2.msra.mxu0 0.0
    %245 = vmatprep.subr.mxu0 0.0
    %246 = vmatpush2.msra.mxu0 0.0
    %247 = vmatprep.subr.mxu0 0.0
    %248 = vmatpush2.msra.mxu0 0.0
    %249 = vmatprep.subr.mxu0 0.0
    %250 = vmatpush2.msra.mxu0 0.0
    %251 = vmatprep.subr.mxu0 0.0
    %252 = vmatpush2.msra.mxu0 0.0
    %253 = vmatprep.subr.mxu0 0.0
    %254 = vmatpush2.msra.mxu0 0.0
    %255 = vmatprep.subr.mxu0 0.0
    %256 = vmatpush2.msra.mxu0 0.0
    %257 = vmatprep.subr.mxu0 0.0
    %258 = vmatpush2.msra.mxu0 0.0
    %259 = vmatprep.subr.mxu0 0.0
    %260 = vmatpush2.msra.mxu0 0.0
    %261 = vmatprep.mubr.f32.mxu0 0.0
    %262 = vmatmul.mubr.f32.gmra.mxu0 %v192
    %v263 = vpop.f32.mrf.mxu0
    %v264 = vadd.f32 %v189, %v263
    %v265 = vpop.f32.mrf.mxu0
    %266 = vmatprep.mubr.f32.mxu0 0.0
    %267 = vmatmul.mubr.f32.gmra.mxu0 %v195
    %v268 = vpop.f32.mrf.mxu0
    %v269 = vadd.f32 %v189, %v268
    %v270 = vpop.f32.mrf.mxu0
    %271 = vdwg.mxu0
    %272 = vst [vmem:[#allocation10] sm:$0xff] %v264
    %273 = vst [vmem:[#allocation10 + $0x8] sm:$0xff] %v269
    %274 = vmatprep.subr.mxu0 0.0
    %275 = vmatpush1.msra.mxu0 0.0
    %276 = vmatprep.subr.mxu0 0.0
    %277 = vmatpush1.msra.mxu0 0.0
    %278 = vmatprep.subr.mxu0 0.0
    %279 = vmatpush1.msra.mxu0 0.0
    %280 = vmatprep.subr.mxu0 0.0
    %281 = vmatpush1.msra.mxu0 0.0
    %282 = vmatprep.subr.mxu0 0.0
    %283 = vmatpush1.msra.mxu0 0.0
    %284 = vmatprep.subr.mxu0 0.0
    %285 = vmatpush1.msra.mxu0 0.0
    %286 = vmatprep.subr.mxu0 0.0
    %287 = vmatpush1.msra.mxu0 0.0
    %288 = vmatprep.subr.mxu0 0.0
    %289 = vmatpush1.msra.mxu0 0.0
    %290 = vmatprep.subr.mxu0 0.0
    %291 = vmatpush1.msra.mxu0 0.0
    %292 = vmatprep.subr.mxu0 0.0
    %293 = vmatpush1.msra.mxu0 0.0
    %294 = vmatprep.subr.mxu0 0.0
    %295 = vmatpush1.msra.mxu0 0.0
    %296 = vmatprep.subr.mxu0 0.0
    %297 = vmatpush1.msra.mxu0 0.0
    %298 = vmatprep.subr.mxu0 0.0
    %299 = vmatpush1.msra.mxu0 %v88
    %300 = vmatprep.subr.mxu0 0.0
    %301 = vmatpush1.msra.mxu0 %v87
    %302 = vmatprep.subr.mxu0 0.0
    %303 = vmatpush1.msra.mxu0 %v86
    %304 = vmatprep.subr.mxu0 0.0
    %305 = vmatpush1.msra.mxu0 %v85
    %306 = vmatprep.subr.mxu0 0.0
    %307 = vmatpush2.msra.mxu0 0.0
    %308 = vmatprep.subr.mxu0 0.0
    %309 = vmatpush2.msra.mxu0 0.0
    %310 = vmatprep.subr.mxu0 0.0
    %311 = vmatpush2.msra.mxu0 0.0
    %312 = vmatprep.subr.mxu0 0.0
    %313 = vmatpush2.msra.mxu0 0.0
    %314 = vmatprep.subr.mxu0 0.0
    %315 = vmatpush2.msra.mxu0 0.0
    %316 = vmatprep.subr.mxu0 0.0
    %317 = vmatpush2.msra.mxu0 0.0
    %318 = vmatprep.subr.mxu0 0.0
    %319 = vmatpush2.msra.mxu0 0.0
    %320 = vmatprep.subr.mxu0 0.0
    %321 = vmatpush2.msra.mxu0 0.0
    %322 = vmatprep.subr.mxu0 0.0
    %323 = vmatpush2.msra.mxu0 0.0
    %324 = vmatprep.subr.mxu0 0.0
    %325 = vmatpush2.msra.mxu0 0.0
    %326 = vmatprep.subr.mxu0 0.0
    %327 = vmatpush2.msra.mxu0 0.0
    %328 = vmatprep.subr.mxu0 0.0
    %329 = vmatpush2.msra.mxu0 0.0
    %330 = vmatprep.subr.mxu0 0.0
    %331 = vmatpush2.msra.mxu0 0.0
    %332 = vmatprep.subr.mxu0 0.0
    %333 = vmatpush2.msra.mxu0 0.0
    %334 = vmatprep.subr.mxu0 0.0
    %335 = vmatpush2.msra.mxu0 0.0
    %336 = vmatprep.subr.mxu0 0.0
    %337 = vmatpush2.msra.mxu0 0.0
    %338 = vmatprep.mubr.f32.mxu0 0.0
    %339 = vmatmul.mubr.f32.gmra.mxu0 %v192
    %v340 = vpop.f32.mrf.mxu0
    %v341 = vadd.f32 0.0, %v340
    %v342 = vpop.f32.mrf.mxu0
    %343 = vmatprep.mubr.f32.mxu0 0.0
    %344 = vmatmul.mubr.f32.gmra.mxu0 %v195
    %v345 = vpop.f32.mrf.mxu0
    %v346 = vadd.f32 0.0, %v345
    %v347 = vpop.f32.mrf.mxu0
    %348 = vdwg.mxu0
    %v349 = vadd.f32 %v175, %v341
    %v350 = vadd.f32 %v180, %v346
    %v351 = vtanh.pop %v349
    %v352 = vtanh.pop %v350
    %v354 = vsel %vm101, %v351, 0
    %v357 = vsel %vm101, %v352, 0
    %359 = vmatprep.subr.mxu0 0.0
    %360 = vmatpush1.msra.mxu0 0.0
    %361 = vmatprep.subr.mxu0 0.0
    %362 = vmatpush1.msra.mxu0 0.0
    %363 = vmatprep.subr.mxu0 0.0
    %364 = vmatpush1.msra.mxu0 0.0
    %365 = vmatprep.subr.mxu0 0.0
    %366 = vmatpush1.msra.mxu0 0.0
    %367 = vmatprep.subr.mxu0 0.0
    %368 = vmatpush1.msra.mxu0 0.0
    %369 = vmatprep.subr.mxu0 0.0
    %370 = vmatpush1.msra.mxu0 0.0
    %371 = vmatprep.subr.mxu0 0.0
    %372 = vmatpush1.msra.mxu0 0.0
    %373 = vmatprep.subr.mxu0 0.0
    %374 = vmatpush1.msra.mxu0 0.0
    %375 = vmatprep.subr.mxu0 0.0
    %376 = vmatpush1.msra.mxu0 0.0
    %377 = vmatprep.subr.mxu0 0.0
    %378 = vmatpush1.msra.mxu0 0.0
    %379 = vmatprep.subr.mxu0 0.0
    %380 = vmatpush1.msra.mxu0 0.0
    %381 = vmatprep.subr.mxu0 0.0
    %382 = vmatpush1.msra.mxu0 0.0
    %383 = vmatprep.subr.mxu0 0.0
    %384 = vmatpush1.msra.mxu0 %v92
    %385 = vmatprep.subr.mxu0 0.0
    %386 = vmatpush1.msra.mxu0 %v91
    %387 = vmatprep.subr.mxu0 0.0
    %388 = vmatpush1.msra.mxu0 %v90
    %389 = vmatprep.subr.mxu0 0.0
    %390 = vmatpush1.msra.mxu0 %v89
    %391 = vmatprep.subr.mxu0 0.0
    %392 = vmatpush2.msra.mxu0 0.0
    %393 = vmatprep.subr.mxu0 0.0
    %394 = vmatpush2.msra.mxu0 0.0
    %395 = vmatprep.subr.mxu0 0.0
    %396 = vmatpush2.msra.mxu0 0.0
    %397 = vmatprep.subr.mxu0 0.0
    %398 = vmatpush2.msra.mxu0 0.0
    %399 = vmatprep.subr.mxu0 0.0
    %400 = vmatpush2.msra.mxu0 0.0
    %401 = vmatprep.subr.mxu0 0.0
    %402 = vmatpush2.msra.mxu0 0.0
    %403 = vmatprep.subr.mxu0 0.0
    %404 = vmatpush2.msra.mxu0 0.0
    %405 = vmatprep.subr.mxu0 0.0
    %406 = vmatpush2.msra.mxu0 0.0
    %407 = vmatprep.subr.mxu0 0.0
    %408 = vmatpush2.msra.mxu0 0.0
    %409 = vmatprep.subr.mxu0 0.0
    %410 = vmatpush2.msra.mxu0 0.0
    %411 = vmatprep.subr.mxu0 0.0
    %412 = vmatpush2.msra.mxu0 0.0
    %413 = vmatprep.subr.mxu0 0.0
    %414 = vmatpush2.msra.mxu0 0.0
    %415 = vmatprep.subr.mxu0 0.0
    %416 = vmatpush2.msra.mxu0 0.0
    %417 = vmatprep.subr.mxu0 0.0
    %418 = vmatpush2.msra.mxu0 0.0
    %419 = vmatprep.subr.mxu0 0.0
    %420 = vmatpush2.msra.mxu0 0.0
    %421 = vmatprep.subr.mxu0 0.0
    %422 = vmatpush2.msra.mxu0 0.0
    %423 = vmatprep.mubr.f32.mxu0 0.0
    %424 = vmatmul.mubr.f32.gmra.mxu0 %v354
    %v425 = vpop.f32.mrf.mxu0
    %v426 = vadd.f32 %v189, %v425
    %v427 = vpop.f32.mrf.mxu0
    %428 = vmatprep.mubr.f32.mxu0 0.0
    %429 = vmatmul.mubr.f32.gmra.mxu0 %v357
    %v430 = vpop.f32.mrf.mxu0
    %v431 = vadd.f32 %v189, %v430
    %v432 = vpop.f32.mrf.mxu0
    %433 = vdwg.mxu0
    %s434 = scalar_lea.vmem [#allocation10], 16
    %435 = vst [vmem:[%s434] sm:$0xff] %v426
    %436 = vst [vmem:[%s434 + $0x8] sm:$0xff] %v431
    %437 = vmatprep.subr.mxu0 0.0
    %438 = vmatpush1.msra.mxu0 0.0
    %439 = vmatprep.subr.mxu0 0.0
    %440 = vmatpush1.msra.mxu0 0.0
    %441 = vmatprep.subr.mxu0 0.0
    %442 = vmatpush1.msra.mxu0 0.0
    %443 = vmatprep.subr.mxu0 0.0
    %444 = vmatpush1.msra.mxu0 0.0
    %445 = vmatprep.subr.mxu0 0.0
    %446 = vmatpush1.msra.mxu0 0.0
    %447 = vmatprep.subr.mxu0 0.0
    %448 = vmatpush1.msra.mxu0 0.0
    %449 = vmatprep.subr.mxu0 0.0
    %450 = vmatpush1.msra.mxu0 0.0
    %451 = vmatprep.subr.mxu0 0.0
    %452 = vmatpush1.msra.mxu0 0.0
    %453 = vmatprep.subr.mxu0 0.0
    %454 = vmatpush1.msra.mxu0 0.0
    %455 = vmatprep.subr.mxu0 0.0
    %456 = vmatpush1.msra.mxu0 0.0
    %457 = vmatprep.subr.mxu0 0.0
    %458 = vmatpush1.msra.mxu0 0.0
    %459 = vmatprep.subr.mxu0 0.0
    %460 = vmatpush1.msra.mxu0 0.0
    %461 = vmatprep.subr.mxu0 0.0
    %462 = vmatpush1.msra.mxu0 %v88
    %463 = vmatprep.subr.mxu0 0.0
    %464 = vmatpush1.msra.mxu0 %v87
    %465 = vmatprep.subr.mxu0 0.0
    %466 = vmatpush1.msra.mxu0 %v86
    %467 = vmatprep.subr.mxu0 0.0
    %468 = vmatpush1.msra.mxu0 %v85
    %469 = vmatprep.subr.mxu0 0.0
    %470 = vmatpush2.msra.mxu0 0.0
    %471 = vmatprep.subr.mxu0 0.0
    %472 = vmatpush2.msra.mxu0 0.0
    %473 = vmatprep.subr.mxu0 0.0
    %474 = vmatpush2.msra.mxu0 0.0
    %475 = vmatprep.subr.mxu0 0.0
    %476 = vmatpush2.msra.mxu0 0.0
    %477 = vmatprep.subr.mxu0 0.0
    %478 = vmatpush2.msra.mxu0 0.0
    %479 = vmatprep.subr.mxu0 0.0
    %480 = vmatpush2.msra.mxu0 0.0
    %481 = vmatprep.subr.mxu0 0.0
    %482 = vmatpush2.msra.mxu0 0.0
    %483 = vmatprep.subr.mxu0 0.0
    %484 = vmatpush2.msra.mxu0 0.0
    %485 = vmatprep.subr.mxu0 0.0
    %486 = vmatpush2.msra.mxu0 0.0
    %487 = vmatprep.subr.mxu0 0.0
    %488 = vmatpush2.msra.mxu0 0.0
    %489 = vmatprep.subr.mxu0 0.0
    %490 = vmatpush2.msra.mxu0 0.0
    %491 = vmatprep.subr.mxu0 0.0
    %492 = vmatpush2.msra.mxu0 0.0
    %493 = vmatprep.subr.mxu0 0.0
    %494 = vmatpush2.msra.mxu0 0.0
    %495 = vmatprep.subr.mxu0 0.0
    %496 = vmatpush2.msra.mxu0 0.0
    %497 = vmatprep.subr.mxu0 0.0
    %498 = vmatpush2.msra.mxu0 0.0
    %499 = vmatprep.subr.mxu0 0.0
    %500 = vmatpush2.msra.mxu0 0.0
    %501 = vmatprep.mubr.f32.mxu0 0.0
    %502 = vmatmul.mubr.f32.gmra.mxu0 %v354
    %v503 = vpop.f32.mrf.mxu0
    %v504 = vadd.f32 0.0, %v503
    %v505 = vpop.f32.mrf.mxu0
    %506 = vmatprep.mubr.f32.mxu0 0.0
    %507 = vmatmul.mubr.f32.gmra.mxu0 %v357
    %v508 = vpop.f32.mrf.mxu0
    %v509 = vadd.f32 0.0, %v508
    %v510 = vpop.f32.mrf.mxu0
    %511 = vdwg.mxu0
    %v512 = vadd.f32 %v175, %v504
    %v513 = vadd.f32 %v180, %v509
    %v514 = vtanh.pop %v512
    %v515 = vtanh.pop %v513
    %v517 = vsel %vm101, %v514, 0
    %v520 = vsel %vm101, %v515, 0
    %522 = vmatprep.subr.mxu0 0.0
    %523 = vmatpush1.msra.mxu0 0.0
    %524 = vmatprep.subr.mxu0 0.0
    %525 = vmatpush1.msra.mxu0 0.0
    %526 = vmatprep.subr.mxu0 0.0
    %527 = vmatpush1.msra.mxu0 0.0
    %528 = vmatprep.subr.mxu0 0.0
    %529 = vmatpush1.msra.mxu0 0.0
    %530 = vmatprep.subr.mxu0 0.0
    %531 = vmatpush1.msra.mxu0 0.0
    %532 = vmatprep.subr.mxu0 0.0
    %533 = vmatpush1.msra.mxu0 0.0
    %534 = vmatprep.subr.mxu0 0.0
    %535 = vmatpush1.msra.mxu0 0.0
    %536 = vmatprep.subr.mxu0 0.0
    %537 = vmatpush1.msra.mxu0 0.0
    %538 = vmatprep.subr.mxu0 0.0
    %539 = vmatpush1.msra.mxu0 0.0
    %540 = vmatprep.subr.mxu0 0.0
    %541 = vmatpush1.msra.mxu0 0.0
    %542 = vmatprep.subr.mxu0 0.0
    %543 = vmatpush1.msra.mxu0 0.0
    %544 = vmatprep.subr.mxu0 0.0
    %545 = vmatpush1.msra.mxu0 0.0
    %546 = vmatprep.subr.mxu0 0.0
    %547 = vmatpush1.msra.mxu0 %v92
    %548 = vmatprep.subr.mxu0 0.0
    %549 = vmatpush1.msra.mxu0 %v91
    %550 = vmatprep.subr.mxu0 0.0
    %551 = vmatpush1.msra.mxu0 %v90
    %552 = vmatprep.subr.mxu0 0.0
    %553 = vmatpush1.msra.mxu0 %v89
    %554 = vmatprep.subr.mxu0 0.0
    %555 = vmatpush2.msra.mxu0 0.0
    %556 = vmatprep.subr.mxu0 0.0
    %557 = vmatpush2.msra.mxu0 0.0
    %558 = vmatprep.subr.mxu0 0.0
    %559 = vmatpush2.msra.mxu0 0.0
    %560 = vmatprep.subr.mxu0 0.0
    %561 = vmatpush2.msra.mxu0 0.0
    %562 = vmatprep.subr.mxu0 0.0
    %563 = vmatpush2.msra.mxu0 0.0
    %564 = vmatprep.subr.mxu0 0.0
    %565 = vmatpush2.msra.mxu0 0.0
    %566 = vmatprep.subr.mxu0 0.0
    %567 = vmatpush2.msra.mxu0 0.0
    %568 = vmatprep.subr.mxu0 0.0
    %569 = vmatpush2.msra.mxu0 0.0
    %570 = vmatprep.subr.mxu0 0.0
    %571 = vmatpush2.msra.mxu0 0.0
    %572 = vmatprep.subr.mxu0 0.0
    %573 = vmatpush2.msra.mxu0 0.0
    %574 = vmatprep.subr.mxu0 0.0
    %575 = vmatpush2.msra.mxu0 0.0
    %576 = vmatprep.subr.mxu0 0.0
    %577 = vmatpush2.msra.mxu0 0.0
    %578 = vmatprep.subr.mxu0 0.0
    %579 = vmatpush2.msra.mxu0 0.0
    %580 = vmatprep.subr.mxu0 0.0
    %581 = vmatpush2.msra.mxu0 0.0
    %582 = vmatprep.subr.mxu0 0.0
    %583 = vmatpush2.msra.mxu0 0.0
    %584 = vmatprep.subr.mxu0 0.0
    %585 = vmatpush2.msra.mxu0 0.0
    %586 = vmatprep.mubr.f32.mxu0 0.0
    %587 = vmatmul.mubr.f32.gmra.mxu0 %v517
    %v588 = vpop.f32.mrf.mxu0
    %v589 = vadd.f32 %v189, %v588
    %v590 = vpop.f32.mrf.mxu0
    %591 = vmatprep.mubr.f32.mxu0 0.0
    %592 = vmatmul.mubr.f32.gmra.mxu0 %v520
    %v593 = vpop.f32.mrf.mxu0
    %v594 = vadd.f32 %v189, %v593
    %v595 = vpop.f32.mrf.mxu0
    %596 = vdwg.mxu0
    %s597 = scalar_lea.vmem [#allocation10], 32
    %598 = vst [vmem:[%s597] sm:$0xff] %v589
    %599 = vst [vmem:[%s597 + $0x8] sm:$0xff] %v594
    %600 = vmatprep.subr.mxu0 0.0
    %601 = vmatpush1.msra.mxu0 0.0
    %602 = vmatprep.subr.mxu0 0.0
    %603 = vmatpush1.msra.mxu0 0.0
    %604 = vmatprep.subr.mxu0 0.0
    %605 = vmatpush1.msra.mxu0 0.0
    %606 = vmatprep.subr.mxu0 0.0
    %607 = vmatpush1.msra.mxu0 0.0
    %608 = vmatprep.subr.mxu0 0.0
    %609 = vmatpush1.msra.mxu0 0.0
    %610 = vmatprep.subr.mxu0 0.0
    %611 = vmatpush1.msra.mxu0 0.0
    %612 = vmatprep.subr.mxu0 0.0
    %613 = vmatpush1.msra.mxu0 0.0
    %614 = vmatprep.subr.mxu0 0.0
    %615 = vmatpush1.msra.mxu0 0.0
    %616 = vmatprep.subr.mxu0 0.0
    %617 = vmatpush1.msra.mxu0 0.0
    %618 = vmatprep.subr.mxu0 0.0
    %619 = vmatpush1.msra.mxu0 0.0
    %620 = vmatprep.subr.mxu0 0.0
    %621 = vmatpush1.msra.mxu0 0.0
    %622 = vmatprep.subr.mxu0 0.0
    %623 = vmatpush1.msra.mxu0 0.0
    %624 = vmatprep.subr.mxu0 0.0
    %625 = vmatpush1.msra.mxu0 %v88
    %626 = vmatprep.subr.mxu0 0.0
    %627 = vmatpush1.msra.mxu0 %v87
    %628 = vmatprep.subr.mxu0 0.0
    %629 = vmatpush1.msra.mxu0 %v86
    %630 = vmatprep.subr.mxu0 0.0
    %631 = vmatpush1.msra.mxu0 %v85
    %632 = vmatprep.subr.mxu0 0.0
    %633 = vmatpush2.msra.mxu0 0.0
    %634 = vmatprep.subr.mxu0 0.0
    %635 = vmatpush2.msra.mxu0 0.0
    %636 = vmatprep.subr.mxu0 0.0
    %637 = vmatpush2.msra.mxu0 0.0
    %638 = vmatprep.subr.mxu0 0.0
    %639 = vmatpush2.msra.mxu0 0.0
    %640 = vmatprep.subr.mxu0 0.0
    %641 = vmatpush2.msra.mxu0 0.0
    %642 = vmatprep.subr.mxu0 0.0
    %643 = vmatpush2.msra.mxu0 0.0
    %644 = vmatprep.subr.mxu0 0.0
    %645 = vmatpush2.msra.mxu0 0.0
    %646 = vmatprep.subr.mxu0 0.0
    %647 = vmatpush2.msra.mxu0 0.0
    %648 = vmatprep.subr.mxu0 0.0
    %649 = vmatpush2.msra.mxu0 0.0
    %650 = vmatprep.subr.mxu0 0.0
    %651 = vmatpush2.msra.mxu0 0.0
    %652 = vmatprep.subr.mxu0 0.0
    %653 = vmatpush2.msra.mxu0 0.0
    %654 = vmatprep.subr.mxu0 0.0
    %655 = vmatpush2.msra.mxu0 0.0
    %656 = vmatprep.subr.mxu0 0.0
    %657 = vmatpush2.msra.mxu0 0.0
    %658 = vmatprep.subr.mxu0 0.0
    %659 = vmatpush2.msra.mxu0 0.0
    %660 = vmatprep.subr.mxu0 0.0
    %661 = vmatpush2.msra.mxu0 0.0
    %662 = vmatprep.subr.mxu0 0.0
    %663 = vmatpush2.msra.mxu0 0.0
    %664 = vmatprep.mubr.f32.mxu0 0.0
    %665 = vmatmul.mubr.f32.gmra.mxu0 %v517
    %v666 = vpop.f32.mrf.mxu0
    %v667 = vadd.f32 0.0, %v666
    %v668 = vpop.f32.mrf.mxu0
    %669 = vmatprep.mubr.f32.mxu0 0.0
    %670 = vmatmul.mubr.f32.gmra.mxu0 %v520
    %v671 = vpop.f32.mrf.mxu0
    %v672 = vadd.f32 0.0, %v671
    %v673 = vpop.f32.mrf.mxu0
    %674 = vdwg.mxu0
    %v675 = vadd.f32 %v175, %v667
    %v676 = vadd.f32 %v180, %v672
    %v677 = vtanh.pop %v675
    %v678 = vtanh.pop %v676
    %v680 = vsel %vm101, %v677, 0
    %v683 = vsel %vm101, %v678, 0
    %685 = vmatprep.subr.mxu0 0.0
    %686 = vmatpush1.msra.mxu0 0.0
    %687 = vmatprep.subr.mxu0 0.0
    %688 = vmatpush1.msra.mxu0 0.0
    %689 = vmatprep.subr.mxu0 0.0
    %690 = vmatpush1.msra.mxu0 0.0
    %691 = vmatprep.subr.mxu0 0.0
    %692 = vmatpush1.msra.mxu0 0.0
    %693 = vmatprep.subr.mxu0 0.0
    %694 = vmatpush1.msra.mxu0 0.0
    %695 = vmatprep.subr.mxu0 0.0
    %696 = vmatpush1.msra.mxu0 0.0
    %697 = vmatprep.subr.mxu0 0.0
    %698 = vmatpush1.msra.mxu0 0.0
    %699 = vmatprep.subr.mxu0 0.0
    %700 = vmatpush1.msra.mxu0 0.0
    %701 = vmatprep.subr.mxu0 0.0
    %702 = vmatpush1.msra.mxu0 0.0
    %703 = vmatprep.subr.mxu0 0.0
    %704 = vmatpush1.msra.mxu0 0.0
    %705 = vmatprep.subr.mxu0 0.0
    %706 = vmatpush1.msra.mxu0 0.0
    %707 = vmatprep.subr.mxu0 0.0
    %708 = vmatpush1.msra.mxu0 0.0
    %709 = vmatprep.subr.mxu0 0.0
    %710 = vmatpush1.msra.mxu0 %v92
    %711 = vmatprep.subr.mxu0 0.0
    %712 = vmatpush1.msra.mxu0 %v91
    %713 = vmatprep.subr.mxu0 0.0
    %714 = vmatpush1.msra.mxu0 %v90
    %715 = vmatprep.subr.mxu0 0.0
    %716 = vmatpush1.msra.mxu0 %v89
    %717 = vmatprep.subr.mxu0 0.0
    %718 = vmatpush2.msra.mxu0 0.0
    %719 = vmatprep.subr.mxu0 0.0
    %720 = vmatpush2.msra.mxu0 0.0
    %721 = vmatprep.subr.mxu0 0.0
    %722 = vmatpush2.msra.mxu0 0.0
    %723 = vmatprep.subr.mxu0 0.0
    %724 = vmatpush2.msra.mxu0 0.0
    %725 = vmatprep.subr.mxu0 0.0
    %726 = vmatpush2.msra.mxu0 0.0
    %727 = vmatprep.subr.mxu0 0.0
    %728 = vmatpush2.msra.mxu0 0.0
    %729 = vmatprep.subr.mxu0 0.0
    %730 = vmatpush2.msra.mxu0 0.0
    %731 = vmatprep.subr.mxu0 0.0
    %732 = vmatpush2.msra.mxu0 0.0
    %733 = vmatprep.subr.mxu0 0.0
    %734 = vmatpush2.msra.mxu0 0.0
    %735 = vmatprep.subr.mxu0 0.0
    %736 = vmatpush2.msra.mxu0 0.0
    %737 = vmatprep.subr.mxu0 0.0
    %738 = vmatpush2.msra.mxu0 0.0
    %739 = vmatprep.subr.mxu0 0.0
    %740 = vmatpush2.msra.mxu0 0.0
    %741 = vmatprep.subr.mxu0 0.0
    %742 = vmatpush2.msra.mxu0 0.0
    %743 = vmatprep.subr.mxu0 0.0
    %744 = vmatpush2.msra.mxu0 0.0
    %745 = vmatprep.subr.mxu0 0.0
    %746 = vmatpush2.msra.mxu0 0.0
    %747 = vmatprep.subr.mxu0 0.0
    %748 = vmatpush2.msra.mxu0 0.0
    %749 = vmatprep.mubr.f32.mxu0 0.0
    %750 = vmatmul.mubr.f32.gmra.mxu0 %v680
    %v751 = vpop.f32.mrf.mxu0
    %v752 = vadd.f32 %v189, %v751
    %v753 = vpop.f32.mrf.mxu0
    %754 = vmatprep.mubr.f32.mxu0 0.0
    %755 = vmatmul.mubr.f32.gmra.mxu0 %v683
    %v756 = vpop.f32.mrf.mxu0
    %v757 = vadd.f32 %v189, %v756
    %v758 = vpop.f32.mrf.mxu0
    %759 = vdwg.mxu0
    %s760 = scalar_lea.vmem [#allocation10], 48
    %761 = vst [vmem:[%s760] sm:$0xff] %v752
    %762 = vst [vmem:[%s760 + $0x8] sm:$0xff] %v757
    %763 = vmatprep.subr.mxu0 0.0
    %764 = vmatpush1.msra.mxu0 0.0
    %765 = vmatprep.subr.mxu0 0.0
    %766 = vmatpush1.msra.mxu0 0.0
    %767 = vmatprep.subr.mxu0 0.0
    %768 = vmatpush1.msra.mxu0 0.0
    %769 = vmatprep.subr.mxu0 0.0
    %770 = vmatpush1.msra.mxu0 0.0
    %771 = vmatprep.subr.mxu0 0.0
    %772 = vmatpush1.msra.mxu0 0.0
    %773 = vmatprep.subr.mxu0 0.0
    %774 = vmatpush1.msra.mxu0 0.0
    %775 = vmatprep.subr.mxu0 0.0
    %776 = vmatpush1.msra.mxu0 0.0
    %777 = vmatprep.subr.mxu0 0.0
    %778 = vmatpush1.msra.mxu0 0.0
    %779 = vmatprep.subr.mxu0 0.0
    %780 = vmatpush1.msra.mxu0 0.0
    %781 = vmatprep.subr.mxu0 0.0
    %782 = vmatpush1.msra.mxu0 0.0
    %783 = vmatprep.subr.mxu0 0.0
    %784 = vmatpush1.msra.mxu0 0.0
    %785 = vmatprep.subr.mxu0 0.0
    %786 = vmatpush1.msra.mxu0 0.0
    %787 = vmatprep.subr.mxu0 0.0
    %788 = vmatpush1.msra.mxu0 %v88
    %789 = vmatprep.subr.mxu0 0.0
    %790 = vmatpush1.msra.mxu0 %v87
    %791 = vmatprep.subr.mxu0 0.0
    %792 = vmatpush1.msra.mxu0 %v86
    %793 = vmatprep.subr.mxu0 0.0
    %794 = vmatpush1.msra.mxu0 %v85
    %795 = vmatprep.subr.mxu0 0.0
    %796 = vmatpush2.msra.mxu0 0.0
    %797 = vmatprep.subr.mxu0 0.0
    %798 = vmatpush2.msra.mxu0 0.0
    %799 = vmatprep.subr.mxu0 0.0
    %800 = vmatpush2.msra.mxu0 0.0
    %801 = vmatprep.subr.mxu0 0.0
    %802 = vmatpush2.msra.mxu0 0.0
    %803 = vmatprep.subr.mxu0 0.0
    %804 = vmatpush2.msra.mxu0 0.0
    %805 = vmatprep.subr.mxu0 0.0
    %806 = vmatpush2.msra.mxu0 0.0
    %807 = vmatprep.subr.mxu0 0.0
    %808 = vmatpush2.msra.mxu0 0.0
    %809 = vmatprep.subr.mxu0 0.0
    %810 = vmatpush2.msra.mxu0 0.0
    %811 = vmatprep.subr.mxu0 0.0
    %812 = vmatpush2.msra.mxu0 0.0
    %813 = vmatprep.subr.mxu0 0.0
    %814 = vmatpush2.msra.mxu0 0.0
    %815 = vmatprep.subr.mxu0 0.0
    %816 = vmatpush2.msra.mxu0 0.0
    %817 = vmatprep.subr.mxu0 0.0
    %818 = vmatpush2.msra.mxu0 0.0
    %819 = vmatprep.subr.mxu0 0.0
    %820 = vmatpush2.msra.mxu0 0.0
    %821 = vmatprep.subr.mxu0 0.0
    %822 = vmatpush2.msra.mxu0 0.0
    %823 = vmatprep.subr.mxu0 0.0
    %824 = vmatpush2.msra.mxu0 0.0
    %825 = vmatprep.subr.mxu0 0.0
    %826 = vmatpush2.msra.mxu0 0.0
    %827 = vmatprep.mubr.f32.mxu0 0.0
    %828 = vmatmul.mubr.f32.gmra.mxu0 %v680
    %v829 = vpop.f32.mrf.mxu0
    %v830 = vadd.f32 0.0, %v829
    %v831 = vpop.f32.mrf.mxu0
    %832 = vmatprep.mubr.f32.mxu0 0.0
    %833 = vmatmul.mubr.f32.gmra.mxu0 %v683
    %v834 = vpop.f32.mrf.mxu0
    %v835 = vadd.f32 0.0, %v834
    %v836 = vpop.f32.mrf.mxu0
    %837 = vdwg.mxu0
    %v838 = vadd.f32 %v175, %v830
    %v839 = vadd.f32 %v180, %v835
    %v840 = vtanh.pop %v838
    %v841 = vtanh.pop %v839
    %v843 = vsel %vm101, %v840, 0
    %v846 = vsel %vm101, %v841, 0
    %848 = vmatprep.subr.mxu0 0.0
    %849 = vmatpush1.msra.mxu0 0.0
    %850 = vmatprep.subr.mxu0 0.0
    %851 = vmatpush1.msra.mxu0 0.0
    %852 = vmatprep.subr.mxu0 0.0
    %853 = vmatpush1.msra.mxu0 0.0
    %854 = vmatprep.subr.mxu0 0.0
    %855 = vmatpush1.msra.mxu0 0.0
    %856 = vmatprep.subr.mxu0 0.0
    %857 = vmatpush1.msra.mxu0 0.0
    %858 = vmatprep.subr.mxu0 0.0
    %859 = vmatpush1.msra.mxu0 0.0
    %860 = vmatprep.subr.mxu0 0.0
    %861 = vmatpush1.msra.mxu0 0.0
    %862 = vmatprep.subr.mxu0 0.0
    %863 = vmatpush1.msra.mxu0 0.0
    %864 = vmatprep.subr.mxu0 0.0
    %865 = vmatpush1.msra.mxu0 0.0
    %866 = vmatprep.subr.mxu0 0.0
    %867 = vmatpush1.msra.mxu0 0.0
    %868 = vmatprep.subr.mxu0 0.0
    %869 = vmatpush1.msra.mxu0 0.0
    %870 = vmatprep.subr.mxu0 0.0
    %871 = vmatpush1.msra.mxu0 0.0
    %872 = vmatprep.subr.mxu0 0.0
    %873 = vmatpush1.msra.mxu0 %v92
    %874 = vmatprep.subr.mxu0 0.0
    %875 = vmatpush1.msra.mxu0 %v91
    %876 = vmatprep.subr.mxu0 0.0
    %877 = vmatpush1.msra.mxu0 %v90
    %878 = vmatprep.subr.mxu0 0.0
    %879 = vmatpush1.msra.mxu0 %v89
    %880 = vmatprep.subr.mxu0 0.0
    %881 = vmatpush2.msra.mxu0 0.0
    %882 = vmatprep.subr.mxu0 0.0
    %883 = vmatpush2.msra.mxu0 0.0
    %884 = vmatprep.subr.mxu0 0.0
    %885 = vmatpush2.msra.mxu0 0.0
    %886 = vmatprep.subr.mxu0 0.0
    %887 = vmatpush2.msra.mxu0 0.0
    %888 = vmatprep.subr.mxu0 0.0
    %889 = vmatpush2.msra.mxu0 0.0
    %890 = vmatprep.subr.mxu0 0.0
    %891 = vmatpush2.msra.mxu0 0.0
    %892 = vmatprep.subr.mxu0 0.0
    %893 = vmatpush2.msra.mxu0 0.0
    %894 = vmatprep.subr.mxu0 0.0
    %895 = vmatpush2.msra.mxu0 0.0
    %896 = vmatprep.subr.mxu0 0.0
    %897 = vmatpush2.msra.mxu0 0.0
    %898 = vmatprep.subr.mxu0 0.0
    %899 = vmatpush2.msra.mxu0 0.0
    %900 = vmatprep.subr.mxu0 0.0
    %901 = vmatpush2.msra.mxu0 0.0
    %902 = vmatprep.subr.mxu0 0.0
    %903 = vmatpush2.msra.mxu0 0.0
    %904 = vmatprep.subr.mxu0 0.0
    %905 = vmatpush2.msra.mxu0 0.0
    %906 = vmatprep.subr.mxu0 0.0
    %907 = vmatpush2.msra.mxu0 0.0
    %908 = vmatprep.subr.mxu0 0.0
    %909 = vmatpush2.msra.mxu0 0.0
    %910 = vmatprep.subr.mxu0 0.0
    %911 = vmatpush2.msra.mxu0 0.0
    %912 = vmatprep.mubr.f32.mxu0 0.0
    %913 = vmatmul.mubr.f32.gmra.mxu0 %v843
    %v914 = vpop.f32.mrf.mxu0
    %v915 = vadd.f32 %v189, %v914
    %v916 = vpop.f32.mrf.mxu0
    %917 = vmatprep.mubr.f32.mxu0 0.0
    %918 = vmatmul.mubr.f32.gmra.mxu0 %v846
    %v919 = vpop.f32.mrf.mxu0
    %v920 = vadd.f32 %v189, %v919
    %v921 = vpop.f32.mrf.mxu0
    %922 = vdwg.mxu0
    %s923 = scalar_lea.vmem [#allocation10], 64
    %924 = vst [vmem:[%s923] sm:$0xff] %v915
    %925 = vst [vmem:[%s923 + $0x8] sm:$0xff] %v920
    %926 = vmatprep.subr.mxu0 0.0
    %927 = vmatpush1.msra.mxu0 0.0
    %928 = vmatprep.subr.mxu0 0.0
    %929 = vmatpush1.msra.mxu0 0.0
    %930 = vmatprep.subr.mxu0 0.0
    %931 = vmatpush1.msra.mxu0 0.0
    %932 = vmatprep.subr.mxu0 0.0
    %933 = vmatpush1.msra.mxu0 0.0
    %934 = vmatprep.subr.mxu0 0.0
    %935 = vmatpush1.msra.mxu0 0.0
    %936 = vmatprep.subr.mxu0 0.0
    %937 = vmatpush1.msra.mxu0 0.0
    %938 = vmatprep.subr.mxu0 0.0
    %939 = vmatpush1.msra.mxu0 0.0
    %940 = vmatprep.subr.mxu0 0.0
    %941 = vmatpush1.msra.mxu0 0.0
    %942 = vmatprep.subr.mxu0 0.0
    %943 = vmatpush1.msra.mxu0 0.0
    %944 = vmatprep.subr.mxu0 0.0
    %945 = vmatpush1.msra.mxu0 0.0
    %946 = vmatprep.subr.mxu0 0.0
    %947 = vmatpush1.msra.mxu0 0.0
    %948 = vmatprep.subr.mxu0 0.0
    %949 = vmatpush1.msra.mxu0 0.0
    %950 = vmatprep.subr.mxu0 0.0
    %951 = vmatpush1.msra.mxu0 %v88
    %952 = vmatprep.subr.mxu0 0.0
    %953 = vmatpush1.msra.mxu0 %v87
    %954 = vmatprep.subr.mxu0 0.0
    %955 = vmatpush1.msra.mxu0 %v86
    %956 = vmatprep.subr.mxu0 0.0
    %957 = vmatpush1.msra.mxu0 %v85
    %958 = vmatprep.subr.mxu0 0.0
    %959 = vmatpush2.msra.mxu0 0.0
    %960 = vmatprep.subr.mxu0 0.0
    %961 = vmatpush2.msra.mxu0 0.0
    %962 = vmatprep.subr.mxu0 0.0
    %963 = vmatpush2.msra.mxu0 0.0
    %964 = vmatprep.subr.mxu0 0.0
    %965 = vmatpush2.msra.mxu0 0.0
    %966 = vmatprep.subr.mxu0 0.0
    %967 = vmatpush2.msra.mxu0 0.0
    %968 = vmatprep.subr.mxu0 0.0
    %969 = vmatpush2.msra.mxu0 0.0
    %970 = vmatprep.subr.mxu0 0.0
    %971 = vmatpush2.msra.mxu0 0.0
    %972 = vmatprep.subr.mxu0 0.0
    %973 = vmatpush2.msra.mxu0 0.0
    %974 = vmatprep.subr.mxu0 0.0
    %975 = vmatpush2.msra.mxu0 0.0
    %976 = vmatprep.subr.mxu0 0.0
    %977 = vmatpush2.msra.mxu0 0.0
    %978 = vmatprep.subr.mxu0 0.0
    %979 = vmatpush2.msra.mxu0 0.0
    %980 = vmatprep.subr.mxu0 0.0
    %981 = vmatpush2.msra.mxu0 0.0
    %982 = vmatprep.subr.mxu0 0.0
    %983 = vmatpush2.msra.mxu0 0.0
    %984 = vmatprep.subr.mxu0 0.0
    %985 = vmatpush2.msra.mxu0 0.0
    %986 = vmatprep.subr.mxu0 0.0
    %987 = vmatpush2.msra.mxu0 0.0
    %988 = vmatprep.subr.mxu0 0.0
    %989 = vmatpush2.msra.mxu0 0.0
    %990 = vmatprep.mubr.f32.mxu0 0.0
    %991 = vmatmul.mubr.f32.gmra.mxu0 %v843
    %v992 = vpop.f32.mrf.mxu0
    %v993 = vadd.f32 0.0, %v992
    %v994 = vpop.f32.mrf.mxu0
    %995 = vmatprep.mubr.f32.mxu0 0.0
    %996 = vmatmul.mubr.f32.gmra.mxu0 %v846
    %v997 = vpop.f32.mrf.mxu0
    %v998 = vadd.f32 0.0, %v997
    %v999 = vpop.f32.mrf.mxu0
    %1000 = vdwg.mxu0
    %v1001 = vadd.f32 %v175, %v993
    %v1002 = vadd.f32 %v180, %v998
    %v1003 = vtanh.pop %v1001
    %v1004 = vtanh.pop %v1002
    %v1006 = vsel %vm101, %v1003, 0
    %v1009 = vsel %vm101, %v1004, 0
    %1011 = vmatprep.subr.mxu0 0.0
    %1012 = vmatpush1.msra.mxu0 0.0
    %1013 = vmatprep.subr.mxu0 0.0
    %1014 = vmatpush1.msra.mxu0 0.0
    %1015 = vmatprep.subr.mxu0 0.0
    %1016 = vmatpush1.msra.mxu0 0.0
    %1017 = vmatprep.subr.mxu0 0.0
    %1018 = vmatpush1.msra.mxu0 0.0
    %1019 = vmatprep.subr.mxu0 0.0
    %1020 = vmatpush1.msra.mxu0 0.0
    %1021 = vmatprep.subr.mxu0 0.0
    %1022 = vmatpush1.msra.mxu0 0.0
    %1023 = vmatprep.subr.mxu0 0.0
    %1024 = vmatpush1.msra.mxu0 0.0
    %1025 = vmatprep.subr.mxu0 0.0
    %1026 = vmatpush1.msra.mxu0 0.0
    %1027 = vmatprep.subr.mxu0 0.0
    %1028 = vmatpush1.msra.mxu0 0.0
    %1029 = vmatprep.subr.mxu0 0.0
    %1030 = vmatpush1.msra.mxu0 0.0
    %1031 = vmatprep.subr.mxu0 0.0
    %1032 = vmatpush1.msra.mxu0 0.0
    %1033 = vmatprep.subr.mxu0 0.0
    %1034 = vmatpush1.msra.mxu0 0.0
    %1035 = vmatprep.subr.mxu0 0.0
    %1036 = vmatpush1.msra.mxu0 %v92
    %1037 = vmatprep.subr.mxu0 0.0
    %1038 = vmatpush1.msra.mxu0 %v91
    %1039 = vmatprep.subr.mxu0 0.0
    %1040 = vmatpush1.msra.mxu0 %v90
    %1041 = vmatprep.subr.mxu0 0.0
    %1042 = vmatpush1.msra.mxu0 %v89
    %1043 = vmatprep.subr.mxu0 0.0
    %1044 = vmatpush2.msra.mxu0 0.0
    %1045 = vmatprep.subr.mxu0 0.0
    %1046 = vmatpush2.msra.mxu0 0.0
    %1047 = vmatprep.subr.mxu0 0.0
    %1048 = vmatpush2.msra.mxu0 0.0
    %1049 = vmatprep.subr.mxu0 0.0
    %1050 = vmatpush2.msra.mxu0 0.0
    %1051 = vmatprep.subr.mxu0 0.0
    %1052 = vmatpush2.msra.mxu0 0.0
    %1053 = vmatprep.subr.mxu0 0.0
    %1054 = vmatpush2.msra.mxu0 0.0
    %1055 = vmatprep.subr.mxu0 0.0
    %1056 = vmatpush2.msra.mxu0 0.0
    %1057 = vmatprep.subr.mxu0 0.0
    %1058 = vmatpush2.msra.mxu0 0.0
    %1059 = vmatprep.subr.mxu0 0.0
    %1060 = vmatpush2.msra.mxu0 0.0
    %1061 = vmatprep.subr.mxu0 0.0
    %1062 = vmatpush2.msra.mxu0 0.0
    %1063 = vmatprep.subr.mxu0 0.0
    %1064 = vmatpush2.msra.mxu0 0.0
    %1065 = vmatprep.subr.mxu0 0.0
    %1066 = vmatpush2.msra.mxu0 0.0
    %1067 = vmatprep.subr.mxu0 0.0
    %1068 = vmatpush2.msra.mxu0 0.0
    %1069 = vmatprep.subr.mxu0 0.0
    %1070 = vmatpush2.msra.mxu0 0.0
    %1071 = vmatprep.subr.mxu0 0.0
    %1072 = vmatpush2.msra.mxu0 0.0
    %1073 = vmatprep.subr.mxu0 0.0
    %1074 = vmatpush2.msra.mxu0 0.0
    %1075 = vmatprep.mubr.f32.mxu0 0.0
    %1076 = vmatmul.mubr.f32.gmra.mxu0 %v1006
    %v1077 = vpop.f32.mrf.mxu0
    %v1078 = vadd.f32 %v189, %v1077
    %v1079 = vpop.f32.mrf.mxu0
    %1080 = vmatprep.mubr.f32.mxu0 0.0
    %1081 = vmatmul.mubr.f32.gmra.mxu0 %v1009
    %v1082 = vpop.f32.mrf.mxu0
    %v1083 = vadd.f32 %v189, %v1082
    %v1084 = vpop.f32.mrf.mxu0
    %1085 = vdwg.mxu0
    %s1086 = scalar_lea.vmem [#allocation10], 80
    %1087 = vst [vmem:[%s1086] sm:$0xff] %v1078
    %1088 = vst [vmem:[%s1086 + $0x8] sm:$0xff] %v1083
    %1089 = vmatprep.subr.mxu0 0.0
    %1090 = vmatpush1.msra.mxu0 0.0
    %1091 = vmatprep.subr.mxu0 0.0
    %1092 = vmatpush1.msra.mxu0 0.0
    %1093 = vmatprep.subr.mxu0 0.0
    %1094 = vmatpush1.msra.mxu0 0.0
    %1095 = vmatprep.subr.mxu0 0.0
    %1096 = vmatpush1.msra.mxu0 0.0
    %1097 = vmatprep.subr.mxu0 0.0
    %1098 = vmatpush1.msra.mxu0 0.0
    %1099 = vmatprep.subr.mxu0 0.0
    %1100 = vmatpush1.msra.mxu0 0.0
    %1101 = vmatprep.subr.mxu0 0.0
    %1102 = vmatpush1.msra.mxu0 0.0
    %1103 = vmatprep.subr.mxu0 0.0
    %1104 = vmatpush1.msra.mxu0 0.0
    %1105 = vmatprep.subr.mxu0 0.0
    %1106 = vmatpush1.msra.mxu0 0.0
    %1107 = vmatprep.subr.mxu0 0.0
    %1108 = vmatpush1.msra.mxu0 0.0
    %1109 = vmatprep.subr.mxu0 0.0
    %1110 = vmatpush1.msra.mxu0 0.0
    %1111 = vmatprep.subr.mxu0 0.0
    %1112 = vmatpush1.msra.mxu0 0.0
    %1113 = vmatprep.subr.mxu0 0.0
    %1114 = vmatpush1.msra.mxu0 %v88
    %1115 = vmatprep.subr.mxu0 0.0
    %1116 = vmatpush1.msra.mxu0 %v87
    %1117 = vmatprep.subr.mxu0 0.0
    %1118 = vmatpush1.msra.mxu0 %v86
    %1119 = vmatprep.subr.mxu0 0.0
    %1120 = vmatpush1.msra.mxu0 %v85
    %1121 = vmatprep.subr.mxu0 0.0
    %1122 = vmatpush2.msra.mxu0 0.0
    %1123 = vmatprep.subr.mxu0 0.0
    %1124 = vmatpush2.msra.mxu0 0.0
    %1125 = vmatprep.subr.mxu0 0.0
    %1126 = vmatpush2.msra.mxu0 0.0
    %1127 = vmatprep.subr.mxu0 0.0
    %1128 = vmatpush2.msra.mxu0 0.0
    %1129 = vmatprep.subr.mxu0 0.0
    %1130 = vmatpush2.msra.mxu0 0.0
    %1131 = vmatprep.subr.mxu0 0.0
    %1132 = vmatpush2.msra.mxu0 0.0
    %1133 = vmatprep.subr.mxu0 0.0
    %1134 = vmatpush2.msra.mxu0 0.0
    %1135 = vmatprep.subr.mxu0 0.0
    %1136 = vmatpush2.msra.mxu0 0.0
    %1137 = vmatprep.subr.mxu0 0.0
    %1138 = vmatpush2.msra.mxu0 0.0
    %1139 = vmatprep.subr.mxu0 0.0
    %1140 = vmatpush2.msra.mxu0 0.0
    %1141 = vmatprep.subr.mxu0 0.0
    %1142 = vmatpush2.msra.mxu0 0.0
    %1143 = vmatprep.subr.mxu0 0.0
    %1144 = vmatpush2.msra.mxu0 0.0
    %1145 = vmatprep.subr.mxu0 0.0
    %1146 = vmatpush2.msra.mxu0 0.0
    %1147 = vmatprep.subr.mxu0 0.0
    %1148 = vmatpush2.msra.mxu0 0.0
    %1149 = vmatprep.subr.mxu0 0.0
    %1150 = vmatpush2.msra.mxu0 0.0
    %1151 = vmatprep.subr.mxu0 0.0
    %1152 = vmatpush2.msra.mxu0 0.0
    %1153 = vmatprep.mubr.f32.mxu0 0.0
    %1154 = vmatmul.mubr.f32.gmra.mxu0 %v1006
    %v1155 = vpop.f32.mrf.mxu0
    %v1156 = vadd.f32 0.0, %v1155
    %v1157 = vpop.f32.mrf.mxu0
    %1158 = vmatprep.mubr.f32.mxu0 0.0
    %1159 = vmatmul.mubr.f32.gmra.mxu0 %v1009
    %v1160 = vpop.f32.mrf.mxu0
    %v1161 = vadd.f32 0.0, %v1160
    %v1162 = vpop.f32.mrf.mxu0
    %1163 = vdwg.mxu0
    %v1164 = vadd.f32 %v175, %v1156
    %v1165 = vadd.f32 %v180, %v1161
    %v1166 = vtanh.pop %v1164
    %v1167 = vtanh.pop %v1165
    %v1169 = vsel %vm101, %v1166, 0
    %v1172 = vsel %vm101, %v1167, 0
    %1174 = vmatprep.subr.mxu0 0.0
    %1175 = vmatpush1.msra.mxu0 0.0
    %1176 = vmatprep.subr.mxu0 0.0
    %1177 = vmatpush1.msra.mxu0 0.0
    %1178 = vmatprep.subr.mxu0 0.0
    %1179 = vmatpush1.msra.mxu0 0.0
    %1180 = vmatprep.subr.mxu0 0.0
    %1181 = vmatpush1.msra.mxu0 0.0
    %1182 = vmatprep.subr.mxu0 0.0
    %1183 = vmatpush1.msra.mxu0 0.0
    %1184 = vmatprep.subr.mxu0 0.0
    %1185 = vmatpush1.msra.mxu0 0.0
    %1186 = vmatprep.subr.mxu0 0.0
    %1187 = vmatpush1.msra.mxu0 0.0
    %1188 = vmatprep.subr.mxu0 0.0
    %1189 = vmatpush1.msra.mxu0 0.0
    %1190 = vmatprep.subr.mxu0 0.0
    %1191 = vmatpush1.msra.mxu0 0.0
    %1192 = vmatprep.subr.mxu0 0.0
    %1193 = vmatpush1.msra.mxu0 0.0
    %1194 = vmatprep.subr.mxu0 0.0
    %1195 = vmatpush1.msra.mxu0 0.0
    %1196 = vmatprep.subr.mxu0 0.0
    %1197 = vmatpush1.msra.mxu0 0.0
    %1198 = vmatprep.subr.mxu0 0.0
    %1199 = vmatpush1.msra.mxu0 %v92
    %1200 = vmatprep.subr.mxu0 0.0
    %1201 = vmatpush1.msra.mxu0 %v91
    %1202 = vmatprep.subr.mxu0 0.0
    %1203 = vmatpush1.msra.mxu0 %v90
    %1204 = vmatprep.subr.mxu0 0.0
    %1205 = vmatpush1.msra.mxu0 %v89
    %1206 = vmatprep.subr.mxu0 0.0
    %1207 = vmatpush2.msra.mxu0 0.0
    %1208 = vmatprep.subr.mxu0 0.0
    %1209 = vmatpush2.msra.mxu0 0.0
    %1210 = vmatprep.subr.mxu0 0.0
    %1211 = vmatpush2.msra.mxu0 0.0
    %1212 = vmatprep.subr.mxu0 0.0
    %1213 = vmatpush2.msra.mxu0 0.0
    %1214 = vmatprep.subr.mxu0 0.0
    %1215 = vmatpush2.msra.mxu0 0.0
    %1216 = vmatprep.subr.mxu0 0.0
    %1217 = vmatpush2.msra.mxu0 0.0
    %1218 = vmatprep.subr.mxu0 0.0
    %1219 = vmatpush2.msra.mxu0 0.0
    %1220 = vmatprep.subr.mxu0 0.0
    %1221 = vmatpush2.msra.mxu0 0.0
    %1222 = vmatprep.subr.mxu0 0.0
    %1223 = vmatpush2.msra.mxu0 0.0
    %1224 = vmatprep.subr.mxu0 0.0
    %1225 = vmatpush2.msra.mxu0 0.0
    %1226 = vmatprep.subr.mxu0 0.0
    %1227 = vmatpush2.msra.mxu0 0.0
    %1228 = vmatprep.subr.mxu0 0.0
    %1229 = vmatpush2.msra.mxu0 0.0
    %1230 = vmatprep.subr.mxu0 0.0
    %1231 = vmatpush2.msra.mxu0 0.0
    %1232 = vmatprep.subr.mxu0 0.0
    %1233 = vmatpush2.msra.mxu0 0.0
    %1234 = vmatprep.subr.mxu0 0.0
    %1235 = vmatpush2.msra.mxu0 0.0
    %1236 = vmatprep.subr.mxu0 0.0
    %1237 = vmatpush2.msra.mxu0 0.0
    %1238 = vmatprep.mubr.f32.mxu0 0.0
    %1239 = vmatmul.mubr.f32.gmra.mxu0 %v1169
    %v1240 = vpop.f32.mrf.mxu0
    %v1241 = vadd.f32 %v189, %v1240
    %v1242 = vpop.f32.mrf.mxu0
    %1243 = vmatprep.mubr.f32.mxu0 0.0
    %1244 = vmatmul.mubr.f32.gmra.mxu0 %v1172
    %v1245 = vpop.f32.mrf.mxu0
    %v1246 = vadd.f32 %v189, %v1245
    %v1247 = vpop.f32.mrf.mxu0
    %1248 = vdwg.mxu0
    %s1249 = scalar_lea.vmem [#allocation10], 96
    %1250 = vst [vmem:[%s1249] sm:$0xff] %v1241
    %1251 = vst [vmem:[%s1249 + $0x8] sm:$0xff] %v1246
    %1252 = vmatprep.subr.mxu0 0.0
    %1253 = vmatpush1.msra.mxu0 0.0
    %1254 = vmatprep.subr.mxu0 0.0
    %1255 = vmatpush1.msra.mxu0 0.0
    %1256 = vmatprep.subr.mxu0 0.0
    %1257 = vmatpush1.msra.mxu0 0.0
    %1258 = vmatprep.subr.mxu0 0.0
    %1259 = vmatpush1.msra.mxu0 0.0
    %1260 = vmatprep.subr.mxu0 0.0
    %1261 = vmatpush1.msra.mxu0 0.0
    %1262 = vmatprep.subr.mxu0 0.0
    %1263 = vmatpush1.msra.mxu0 0.0
    %1264 = vmatprep.subr.mxu0 0.0
    %1265 = vmatpush1.msra.mxu0 0.0
    %1266 = vmatprep.subr.mxu0 0.0
    %1267 = vmatpush1.msra.mxu0 0.0
    %1268 = vmatprep.subr.mxu0 0.0
    %1269 = vmatpush1.msra.mxu0 0.0
    %1270 = vmatprep.subr.mxu0 0.0
    %1271 = vmatpush1.msra.mxu0 0.0
    %1272 = vmatprep.subr.mxu0 0.0
    %1273 = vmatpush1.msra.mxu0 0.0
    %1274 = vmatprep.subr.mxu0 0.0
    %1275 = vmatpush1.msra.mxu0 0.0
    %1276 = vmatprep.subr.mxu0 0.0
    %1277 = vmatpush1.msra.mxu0 %v88
    %1278 = vmatprep.subr.mxu0 0.0
    %1279 = vmatpush1.msra.mxu0 %v87
    %1280 = vmatprep.subr.mxu0 0.0
    %1281 = vmatpush1.msra.mxu0 %v86
    %1282 = vmatprep.subr.mxu0 0.0
    %1283 = vmatpush1.msra.mxu0 %v85
    %1284 = vmatprep.subr.mxu0 0.0
    %1285 = vmatpush2.msra.mxu0 0.0
    %1286 = vmatprep.subr.mxu0 0.0
    %1287 = vmatpush2.msra.mxu0 0.0
    %1288 = vmatprep.subr.mxu0 0.0
    %1289 = vmatpush2.msra.mxu0 0.0
    %1290 = vmatprep.subr.mxu0 0.0
    %1291 = vmatpush2.msra.mxu0 0.0
    %1292 = vmatprep.subr.mxu0 0.0
    %1293 = vmatpush2.msra.mxu0 0.0
    %1294 = vmatprep.subr.mxu0 0.0
    %1295 = vmatpush2.msra.mxu0 0.0
    %1296 = vmatprep.subr.mxu0 0.0
    %1297 = vmatpush2.msra.mxu0 0.0
    %1298 = vmatprep.subr.mxu0 0.0
    %1299 = vmatpush2.msra.mxu0 0.0
    %1300 = vmatprep.subr.mxu0 0.0
    %1301 = vmatpush2.msra.mxu0 0.0
    %1302 = vmatprep.subr.mxu0 0.0
    %1303 = vmatpush2.msra.mxu0 0.0
    %1304 = vmatprep.subr.mxu0 0.0
    %1305 = vmatpush2.msra.mxu0 0.0
    %1306 = vmatprep.subr.mxu0 0.0
    %1307 = vmatpush2.msra.mxu0 0.0
    %1308 = vmatprep.subr.mxu0 0.0
    %1309 = vmatpush2.msra.mxu0 0.0
    %1310 = vmatprep.subr.mxu0 0.0
    %1311 = vmatpush2.msra.mxu0 0.0
    %1312 = vmatprep.subr.mxu0 0.0
    %1313 = vmatpush2.msra.mxu0 0.0
    %1314 = vmatprep.subr.mxu0 0.0
    %1315 = vmatpush2.msra.mxu0 0.0
    %1316 = vmatprep.mubr.f32.mxu0 0.0
    %1317 = vmatmul.mubr.f32.gmra.mxu0 %v1169
    %v1318 = vpop.f32.mrf.mxu0
    %v1319 = vadd.f32 0.0, %v1318
    %v1320 = vpop.f32.mrf.mxu0
    %1321 = vmatprep.mubr.f32.mxu0 0.0
    %1322 = vmatmul.mubr.f32.gmra.mxu0 %v1172
    %v1323 = vpop.f32.mrf.mxu0
    %v1324 = vadd.f32 0.0, %v1323
    %v1325 = vpop.f32.mrf.mxu0
    %1326 = vdwg.mxu0
    %v1327 = vadd.f32 %v175, %v1319
    %v1328 = vadd.f32 %v180, %v1324
    %v1329 = vtanh.pop %v1327
    %v1330 = vtanh.pop %v1328
    %v1332 = vsel %vm101, %v1329, 0
    %v1335 = vsel %vm101, %v1330, 0
    %1337 = vmatprep.subr.mxu0 0.0
    %1338 = vmatpush1.msra.mxu0 0.0
    %1339 = vmatprep.subr.mxu0 0.0
    %1340 = vmatpush1.msra.mxu0 0.0
    %1341 = vmatprep.subr.mxu0 0.0
    %1342 = vmatpush1.msra.mxu0 0.0
    %1343 = vmatprep.subr.mxu0 0.0
    %1344 = vmatpush1.msra.mxu0 0.0
    %1345 = vmatprep.subr.mxu0 0.0
    %1346 = vmatpush1.msra.mxu0 0.0
    %1347 = vmatprep.subr.mxu0 0.0
    %1348 = vmatpush1.msra.mxu0 0.0
    %1349 = vmatprep.subr.mxu0 0.0
    %1350 = vmatpush1.msra.mxu0 0.0
    %1351 = vmatprep.subr.mxu0 0.0
    %1352 = vmatpush1.msra.mxu0 0.0
    %1353 = vmatprep.subr.mxu0 0.0
    %1354 = vmatpush1.msra.mxu0 0.0
    %1355 = vmatprep.subr.mxu0 0.0
    %1356 = vmatpush1.msra.mxu0 0.0
    %1357 = vmatprep.subr.mxu0 0.0
    %1358 = vmatpush1.msra.mxu0 0.0
    %1359 = vmatprep.subr.mxu0 0.0
    %1360 = vmatpush1.msra.mxu0 0.0
    %1361 = vmatprep.subr.mxu0 0.0
    %1362 = vmatpush1.msra.mxu0 %v92
    %1363 = vmatprep.subr.mxu0 0.0
    %1364 = vmatpush1.msra.mxu0 %v91
    %1365 = vmatprep.subr.mxu0 0.0
    %1366 = vmatpush1.msra.mxu0 %v90
    %1367 = vmatprep.subr.mxu0 0.0
    %1368 = vmatpush1.msra.mxu0 %v89
    %1369 = vmatprep.subr.mxu0 0.0
    %1370 = vmatpush2.msra.mxu0 0.0
    %1371 = vmatprep.subr.mxu0 0.0
    %1372 = vmatpush2.msra.mxu0 0.0
    %1373 = vmatprep.subr.mxu0 0.0
    %1374 = vmatpush2.msra.mxu0 0.0
    %1375 = vmatprep.subr.mxu0 0.0
    %1376 = vmatpush2.msra.mxu0 0.0
    %1377 = vmatprep.subr.mxu0 0.0
    %1378 = vmatpush2.msra.mxu0 0.0
    %1379 = vmatprep.subr.mxu0 0.0
    %1380 = vmatpush2.msra.mxu0 0.0
    %1381 = vmatprep.subr.mxu0 0.0
    %1382 = vmatpush2.msra.mxu0 0.0
    %1383 = vmatprep.subr.mxu0 0.0
    %1384 = vmatpush2.msra.mxu0 0.0
    %1385 = vmatprep.subr.mxu0 0.0
    %1386 = vmatpush2.msra.mxu0 0.0
    %1387 = vmatprep.subr.mxu0 0.0
    %1388 = vmatpush2.msra.mxu0 0.0
    %1389 = vmatprep.subr.mxu0 0.0
    %1390 = vmatpush2.msra.mxu0 0.0
    %1391 = vmatprep.subr.mxu0 0.0
    %1392 = vmatpush2.msra.mxu0 0.0
    %1393 = vmatprep.subr.mxu0 0.0
    %1394 = vmatpush2.msra.mxu0 0.0
    %1395 = vmatprep.subr.mxu0 0.0
    %1396 = vmatpush2.msra.mxu0 0.0
    %1397 = vmatprep.subr.mxu0 0.0
    %1398 = vmatpush2.msra.mxu0 0.0
    %1399 = vmatprep.subr.mxu0 0.0
    %1400 = vmatpush2.msra.mxu0 0.0
    %1401 = vmatprep.mubr.f32.mxu0 0.0
    %1402 = vmatmul.mubr.f32.gmra.mxu0 %v1332
    %v1403 = vpop.f32.mrf.mxu0
    %v1404 = vadd.f32 %v189, %v1403
    %v1405 = vpop.f32.mrf.mxu0
    %1406 = vmatprep.mubr.f32.mxu0 0.0
    %1407 = vmatmul.mubr.f32.gmra.mxu0 %v1335
    %v1408 = vpop.f32.mrf.mxu0
    %v1409 = vadd.f32 %v189, %v1408
    %v1410 = vpop.f32.mrf.mxu0
    %1411 = vdwg.mxu0
    %s1412 = scalar_lea.vmem [#allocation10], 112
    %1413 = vst [vmem:[%s1412] sm:$0xff] %v1404
    %1414 = vst [vmem:[%s1412 + $0x8] sm:$0xff] %v1409
    // Predicated region
    $region42: #{tpu_custom_call.1} parent=1 // pred_check
      _
    $region43: #{tpu_custom_call.1} parent=1 // pred_check_branch
      %1416 = sbr.rel (0) target = $region45
    $region44: #{tpu_custom_call.1} parent=1 // pred_region
      %s1418 = ssub.s32 2048, 2048
      %1419 = vsyncadd [#allocation4], %s1418
      %s1420 = sshll.u32 [#allocation10], 4
      %s1421 = int_to_ptr.vmem [resolvable:$true] %s1420
      %1426 = dma.vmem_to_hbm [thread:$0]  %s1421, 2048, %s6, [#allocation4], 128, 128, 8
    $region45: #{tpu_custom_call.1} parent=1 // pred_fallthru
      _
    // Predicated region
    $region46: #{tpu_custom_call.1} parent=1 // pred_check
      _
    $region47: #{tpu_custom_call.1} parent=1 // pred_check_branch
      %1428 = sbr.rel (0) target = $region49
    $region48: #{tpu_custom_call.1} parent=1 // pred_region
      %1429 = dma.done [#allocation4], 2048
    $region49: #{tpu_custom_call.1} parent=1 // pred_fallthru
      _
    %1430 = vsyncpa [#allocation3], 1
    %1431 = vsyncpa [#allocation6], 1
    %1432 = vsyncpa [#allocation9], 1
    %1433 = vsyncpa [#allocation4], 1

</llo_original>
